<compile_context>
chip_gen: v7x
topology: tpu7x:2x2x1
jax: 0.10.0
libtpu: 0.0.40
codegen_flags: <defaults>
</compile_context>

<pallas_src>
import jax
import jax.numpy as jnp
from jax import lax
from jax.experimental import pallas as pl
from jax.experimental.pallas import tpu as pltpu

LANES = 128
F32 = jnp.float32
# bf16 MXU operands on real TPU hardware; f32 fallback where bf16xbf16->f32
# dots cannot be executed (e.g. CPU interpret-mode execution of the body).
MXU_DTYPE = jnp.bfloat16 if jax.default_backend() == "tpu" else jnp.float32


# ----------------------------------------------------------------------------
# Fused forward kernel: whole model in one VMEM-resident Pallas call.
# ----------------------------------------------------------------------------
def _make_kernel(dims, woffs):
    (B, S, V, Dtok, F, Fe, H, Dc, Hp, N, E) = dims
    BS = B * S

    def kernel(tok_ref,      # [B*S, 1] int32 flattened token ids
               x_ref,        # [N, F]   f32   node features
               eattr_ref,    # [E, Fe]  f32   edge features
               src_ref,      # [E, 1]   int32 edge source node ids
               dst_ref,      # [1, E]   int32 edge destination node ids
               batch_ref,    # [1, N]   int32 graph id per node
               w_ref,        # [R, 128] MXU_DTYPE packed weights (16-row aligned)
               b_ref,        # [8, 128] f32   packed biases
               out_ref):     # [B, 128] f32   lane-dense output (sliced outside)

        def W(name, rows, cols):
            r0 = woffs[name]                       # static, multiple of 16
            return w_ref[r0:r0 + rows, 0:cols]

        def Bv(row, cols):
            return b_ref[row:row + 1, 0:cols]

        def onehot(iota, idx):
            # select (VPU) instead of bool->float cast; exact 1.0/0.0.
            return jnp.where(iota == idx, 1.0, 0.0).astype(MXU_DTYPE)

        # ---- token branch: mean-pooled embedding -> linear + ReLU ------------
        tok_oh = onehot(lax.broadcasted_iota(jnp.int32, (BS, V), 1),
                        tok_ref[...])                                   # [BS, V]
        iota_b = lax.broadcasted_iota(jnp.int32, (B, BS), 0)
        iota_j = lax.broadcasted_iota(jnp.int32, (B, BS), 1)
        seg = jnp.where(jnp.logical_and(iota_j >= iota_b * S,
                                        iota_j < (iota_b + 1) * S),
                        1.0, 0.0).astype(MXU_DTYPE)                     # [B, BS]
        tok_counts = jnp.dot(seg, tok_oh,
                             preferred_element_type=F32) * (1.0 / S)    # [B, V]
        tok_pooled = jnp.dot(tok_counts.astype(MXU_DTYPE), W("emb", V, Dtok),
                             preferred_element_type=F32)                # [B, Dtok]
        tok_h = jnp.maximum(
            jnp.dot(tok_pooled.astype(MXU_DTYPE), W("w_tok", Dtok, H),
                    preferred_element_type=F32) + Bv(0, H), 0.0)        # [B, H]
        # TODO(synk): no padding-token mask (reference module does not specify one).

        # ---- graph branch: one MP layer with edge features -------------------
        xh = jnp.dot(x_ref[...].astype(MXU_DTYPE), W("w_node", F, H),
                     preferred_element_type=F32)                        # [N, H]
        gather = onehot(lax.broadcasted_iota(jnp.int32, (E, N), 1),
                        src_ref[...])                                   # [E, N]
        emsg = jnp.dot(eattr_ref[...].astype(MXU_DTYPE), W("w_edge", Fe, H),
                       preferred_element_type=F32)                      # [E, H]
        msg = jnp.maximum(
            jnp.dot(gather, xh.astype(MXU_DTYPE),
                    preferred_element_type=F32) + emsg + Bv(1, H), 0.0)  # [E, H]
        scatter = onehot(lax.broadcasted_iota(jnp.int32, (N, E), 0),
                         dst_ref[...])                                  # [N, E]
        agg = jnp.dot(scatter, msg.astype(MXU_DTYPE),
                      preferred_element_type=F32)                       # [N, H]
        node_h = jnp.maximum(
            jnp.dot(agg.astype(MXU_DTYPE), W("w_upd", H, H),
                    preferred_element_type=F32) + Bv(2, H), 0.0)        # [N, H]

        # per-graph mean pooling, built from `batch` ids in-kernel.
        g_oh = jnp.where(lax.broadcasted_iota(jnp.int32, (B, N), 0)
                         == batch_ref[...], 1.0, 0.0)                   # [B, N] f32
        cnt = jnp.maximum(jnp.sum(g_oh, axis=1, keepdims=True), 1.0)    # [B, 1]
        pool = (g_oh / cnt).astype(MXU_DTYPE)                           # [B, N]
        graph_h = jnp.dot(pool, node_h.astype(MXU_DTYPE),
                          preferred_element_type=F32)                   # [B, H]

        # ---- combine: tok_h @ Wa + graph_h @ Wb (no concat) ------------------
        comb = jnp.maximum(
            jnp.dot(tok_h.astype(MXU_DTYPE), W("w_comb_a", H, Dc),
                    preferred_element_type=F32)
            + jnp.dot(graph_h.astype(MXU_DTYPE), W("w_comb_b", H, Dc),
                      preferred_element_type=F32)
            + Bv(3, Dc), 0.0)                                           # [B, Dc]

        # ---- predictor: Linear -> ReLU -> Linear (lane-padded output) --------
        p1 = jnp.maximum(
            jnp.dot(comb.astype(MXU_DTYPE), W("w_p1", Dc, Hp),
                    preferred_element_type=F32) + Bv(4, Hp), 0.0)       # [B, Hp]
        out = jnp.dot(p1.astype(MXU_DTYPE), W("w_p2", Hp, LANES),
                      preferred_element_type=F32) + Bv(5, LANES)        # [B, 128]

        out_ref[...] = out.astype(out_ref.dtype)

    return kernel


# ----------------------------------------------------------------------------
# One-time parameter packing (call ONCE at parameter-load time, not per step).
# One MXU-dtype weight slab + one f32 bias slab; blocks 16-row aligned so every
# in-kernel static slice starts on a bf16 sublane-tile boundary.
# ----------------------------------------------------------------------------
def pack_params(params, n_out):
    blocks, offs, r = [], {}, 0

    def add(name, w):
        nonlocal r
        rows, cols = w.shape
        assert cols <= LANES, (name, w.shape)
        rows_p = ((rows + 15) // 16) * 16
        buf = jnp.zeros((rows_p, LANES), F32).at[:rows, :cols].set(w.astype(F32))
        offs[name] = r
        blocks.append(buf)
        r += rows_p

    add("emb", params["emb_table"])
    add("w_tok", params["w_tok"])
    add("w_node", params["w_node"])
    add("w_edge", params["w_edge"])
    add("w_upd", params["w_upd"])
    add("w_comb_a", params["w_comb_a"])
    add("w_comb_b", params["w_comb_b"])
    add("w_p1", params["w_p1"])
    hp = params["w_p2"].shape[0]
    w_p2_pad = jnp.zeros((hp, LANES), F32).at[:, :n_out].set(params["w_p2"])
    add("w_p2", w_p2_pad)

    w_pack = jnp.concatenate(blocks, axis=0).astype(MXU_DTYPE)

    b_pack = jnp.zeros((8, LANES), F32)
    for row, name in enumerate(["b_tok", "b_msg", "b_upd",
                                "b_comb", "b_p1", "b_p2"]):
        v = params[name].reshape(-1)
        b_pack = b_pack.at[row, :v.shape[0]].set(v)   # padded lanes stay 0

    wdims = {
        "V": params["emb_table"].shape[0],
        "Dtok": params["emb_table"].shape[1],
        "H": params["w_tok"].shape[1],
        "Dc": params["w_comb_a"].shape[1],
        "Hp": params["w_p1"].shape[1],
        "n_out": n_out,
    }
    return w_pack, b_pack, offs, wdims


# ----------------------------------------------------------------------------
# Forward wrapper: only index reshapes outside the kernel; all compute inside.
# ----------------------------------------------------------------------------
def make_fullmodel_forward(woffs, wdims, *, num_graphs):
    V, Dtok, H = wdims["V"], wdims["Dtok"], wdims["H"]
    Dc, Hp, n_out = wdims["Dc"], wdims["Hp"], wdims["n_out"]

    @jax.jit
    def forward(w_pack, b_pack, token_idx, x, edge_index, edge_attr, batch):
        B, S = token_idx.shape
        N, F = x.shape
        E = edge_index.shape[1]
        Fe = edge_attr.shape[1]
        assert B == num_graphs

        dims = (B, S, V, Dtok, F, Fe, H, Dc, Hp, N, E)
        kernel = _make_kernel(dims, woffs)

        tok_flat = token_idx.reshape(B * S, 1).astype(jnp.int32)
        src = edge_index[0].reshape(E, 1).astype(jnp.int32)
        dst = edge_index[1].reshape(1, E).astype(jnp.int32)
        bat = batch.reshape(1, N).astype(jnp.int32)

        inputs = (tok_flat, x.astype(F32), edge_attr.astype(F32),
                  src, dst, bat, w_pack, b_pack)

        flops = 2 * (B * (B * S) * V + B * V * Dtok + B * Dtok * H
                     + N * F * H + E * N * H + E * Fe * H + N * E * H
                     + N * H * H + B * N * H + 2 * B * H * Dc
                     + B * Dc * Hp + B * Hp * LANES)
        in_bytes = sum(int(a.size) * a.dtype.itemsize for a in inputs)
        bytes_accessed = in_bytes + B * LANES * 4
        mxu_sz = jnp.dtype(MXU_DTYPE).itemsize
        interm_bytes = ((B * S * V + B * B * S + 2 * E * N) * mxu_sz
                        + (E * H + 2 * N * H + 3 * B * H + B * Dc + B * Hp) * 4)
        vmem_limit = int(min(64 << 20,
                             max(2 << 20, 4 * (in_bytes + interm_bytes))))

        vmem = pl.BlockSpec(memory_space=pltpu.MemorySpace.VMEM)
        out_padded = pl.pallas_call(
            kernel,
            out_shape=jax.ShapeDtypeStruct((B, LANES), F32),
            in_specs=[vmem] * len(inputs),
            out_specs=vmem,
            compiler_params=pltpu.CompilerParams(vmem_limit_bytes=vmem_limit),
            cost_estimate=pl.CostEstimate(flops=flops, transcendentals=0,
                                          bytes_accessed=bytes_accessed),
        )(*inputs)
        return out_padded[:, :n_out]

    return forward


# ----------------------------------------------------------------------------
# Pure-JAX f32 reference (same math, un-fused) for a sanity check.
# ----------------------------------------------------------------------------
def fullmodel_reference(params, token_idx, x, edge_index, edge_attr, batch,
                        num_graphs):
    tok_emb = params["emb_table"][token_idx]                           # [B, S, Dtok]
    tok_pooled = tok_emb.mean(axis=1)
    tok_h = jax.nn.relu(tok_pooled @ params["w_tok"] + params["b_tok"])
    x_src = x[edge_index[0]]
    msg = jax.nn.relu(x_src @ params["w_node"] + edge_attr @ params["w_edge"]
                      + params["b_msg"])
    N = x.shape[0]
    agg = jnp.zeros((N, msg.shape[1]), F32).at[edge_index[1]].add(msg)
    node_h = jax.nn.relu(agg @ params["w_upd"] + params["b_upd"])
    gsum = jnp.zeros((num_graphs, node_h.shape[1]), F32).at[batch].add(node_h)
    cnt = jnp.maximum(jnp.zeros((num_graphs, 1), F32).at[batch].add(1.0), 1.0)
    graph_h = gsum / cnt
    comb = jax.nn.relu(tok_h @ params["w_comb_a"] + graph_h @ params["w_comb_b"]
                       + params["b_comb"])
    p1 = jax.nn.relu(comb @ params["w_p1"] + params["b_p1"])
    return p1 @ params["w_p2"] + params["b_p2"]


# ----------------------------------------------------------------------------
# Deterministic parameter init (synthetic; shapes implied by the forward).
# ----------------------------------------------------------------------------
def init_params(key, *, vocab, d_tok, node_feat, edge_feat, hidden,
                d_comb, pred_hidden, n_out):
    ks = jax.random.split(key, 12)

    def w(k, shape, scale=0.1):
        return (scale * jax.random.normal(k, shape)).astype(F32)

    return {
        "emb_table": w(ks[0], (vocab, d_tok)),
        "w_tok":     w(ks[1], (d_tok, hidden)),
        "b_tok":     jnp.zeros((1, hidden), F32),
        "w_node":    w(ks[2], (node_feat, hidden)),
        "w_edge":    w(ks[3], (edge_feat, hidden)),
        "b_msg":     jnp.zeros((1, hidden), F32),
        "w_upd":     w(ks[4], (hidden, hidden)),
        "b_upd":     jnp.zeros((1, hidden), F32),
        "w_comb_a":  w(ks[5], (hidden, d_comb)),
        "w_comb_b":  w(ks[6], (hidden, d_comb)),
        "b_comb":    jnp.zeros((1, d_comb), F32),
        "w_p1":      w(ks[7], (d_comb, pred_hidden)),
        "b_p1":      jnp.zeros((1, pred_hidden), F32),
        "w_p2":      w(ks[8], (pred_hidden, n_out)),
        "b_p2":      jnp.zeros((1, n_out), F32),
    }


if __name__ == "__main__":
    # ClinTox-like synthetic problem, sized to fill (8,128)/(16,128) tiles.
    B = 8            # graphs / molecules in the batch
    S = 16           # SMILES token sequence length
    VOCAB = 128
    D_TOK = 128
    N_NODES = 64     # total atoms across the batch
    E_EDGES = 128    # total bonds (directed) across the batch
    F_NODE = 16
    F_EDGE = 8
    HIDDEN = 128
    D_COMB = 128
    PRED_HIDDEN = 128
    N_OUT = 2        # ClinTox: 2 tasks

    key = jax.random.PRNGKey(0)
    k_p, k_tok, k_x, k_src, k_dst, k_ea = jax.random.split(key, 6)

    params = init_params(
        k_p, vocab=VOCAB, d_tok=D_TOK, node_feat=F_NODE, edge_feat=F_EDGE,
        hidden=HIDDEN, d_comb=D_COMB, pred_hidden=PRED_HIDDEN, n_out=N_OUT)

    token_idx = jax.random.randint(k_tok, (B, S), 0, VOCAB, dtype=jnp.int32)
    x = jax.random.normal(k_x, (N_NODES, F_NODE), dtype=F32)
    src = jax.random.randint(k_src, (E_EDGES,), 0, N_NODES, dtype=jnp.int32)
    dst = jax.random.randint(k_dst, (E_EDGES,), 0, N_NODES, dtype=jnp.int32)
    edge_index = jnp.stack([src, dst], axis=0)                          # [2, E]
    edge_attr = jax.random.normal(k_ea, (E_EDGES, F_EDGE), dtype=F32)
    batch = jnp.repeat(jnp.arange(B, dtype=jnp.int32), N_NODES // B)    # [N]

    # One-time packing (outside the per-step path).
    w_pack, b_pack, woffs, wdims = pack_params(params, N_OUT)
    w_pack, b_pack = jax.block_until_ready((w_pack, b_pack))

    forward = make_fullmodel_forward(woffs, wdims, num_graphs=B)
    out = forward(w_pack, b_pack, token_idx, x, edge_index, edge_attr, batch)
    out = jax.block_until_ready(out)

    assert out.shape == (B, N_OUT), out.shape
    assert bool(jnp.all(jnp.isfinite(out)))

    ref = fullmodel_reference(params, token_idx, x, edge_index, edge_attr,
                              batch, num_graphs=B)
    err = float(jnp.max(jnp.abs(out - ref)))
    assert err < 5e-2, f"max abs diff vs f32 reference too large: {err}"

    print("KERNEL_OK")
</pallas_src>

<mosaic_0001>
module attributes {stable_mosaic.version = 11 : i64} {
  func.func @kernel(%arg0: memref<128x1xi32, #tpu.memory_space<vmem>>, %arg1: memref<64x16xf32, #tpu.memory_space<vmem>>, %arg2: memref<128x8xf32, #tpu.memory_space<vmem>>, %arg3: memref<128x1xi32, #tpu.memory_space<vmem>>, %arg4: memref<1x128xi32, #tpu.memory_space<vmem>>, %arg5: memref<1x64xi32, #tpu.memory_space<vmem>>, %arg6: memref<928x128xf32, #tpu.memory_space<vmem>>, %arg7: memref<8x128xf32, #tpu.memory_space<vmem>>, %arg8: memref<8x128xf32, #tpu.memory_space<vmem>>) attributes {dimension_semantics = [], scalar_prefetch = 0 : i64, scratch_operands = 0 : i64, tpu.core_type = #tpu.core_type<tc>} {
    %0 = tpu.iota {dimensions = array<i32: 1>} : vector<128x128xi32>
    %c0 = arith.constant 0 : index
    %c0_0 = arith.constant 0 : index
    %1 = vector.load %arg0[%c0, %c0_0] : memref<128x1xi32, #tpu.memory_space<vmem>>, vector<128x1xi32>
    %2 = vector.broadcast %1 : vector<128x1xi32> to vector<128x128xi32>
    %3 = arith.cmpi eq, %0, %2 : vector<128x128xi32>
    %cst = arith.constant 1.000000e+00 : f32
    %cst_1 = arith.constant 0.000000e+00 : f32
    %4 = vector.broadcast %cst : f32 to vector<128x128xf32>
    %5 = vector.broadcast %cst_1 : f32 to vector<128x128xf32>
    %6 = arith.select %3, %4, %5 : vector<128x128xi1>, vector<128x128xf32>
    %7 = tpu.iota {dimensions = array<i32: 0>} : vector<8x128xi32>
    %8 = tpu.iota {dimensions = array<i32: 1>} : vector<8x128xi32>
    %c16_i32 = arith.constant 16 : i32
    %9 = vector.broadcast %c16_i32 : i32 to vector<8x128xi32>
    %10 = arith.muli %7, %9 : vector<8x128xi32>
    %11 = arith.cmpi sge, %8, %10 : vector<8x128xi32>
    %c1_i32 = arith.constant 1 : i32
    %12 = vector.broadcast %c1_i32 : i32 to vector<8x128xi32>
    %13 = arith.addi %7, %12 : vector<8x128xi32>
    %c16_i32_2 = arith.constant 16 : i32
    %14 = vector.broadcast %c16_i32_2 : i32 to vector<8x128xi32>
    %15 = arith.muli %13, %14 : vector<8x128xi32>
    %16 = arith.cmpi slt, %8, %15 : vector<8x128xi32>
    %17 = arith.andi %11, %16 : vector<8x128xi1>
    %cst_3 = arith.constant 1.000000e+00 : f32
    %cst_4 = arith.constant 0.000000e+00 : f32
    %18 = vector.broadcast %cst_3 : f32 to vector<8x128xf32>
    %19 = vector.broadcast %cst_4 : f32 to vector<8x128xf32>
    %20 = arith.select %17, %18, %19 : vector<8x128xi1>, vector<8x128xf32>
    %cst_5 = arith.constant dense<0.000000e+00> : vector<8x128xf32>
    %21 = tpu.matmul %20, %6, %cst_5 {dimension_numbers = #tpu.dot_dimension_numbers<[1], [0], [0], [1], [0, 0, 1, 1], [], []>} : vector<8x128xf32>, vector<128x128xf32>, vector<8x128xf32> -> vector<8x128xf32>
    %cst_6 = arith.constant 6.250000e-02 : f32
    %22 = vector.broadcast %cst_6 : f32 to vector<8x128xf32>
    %23 = arith.mulf %21, %22 : vector<8x128xf32>
    %c0_7 = arith.constant 0 : index
    %c0_8 = arith.constant 0 : index
    %24 = vector.load %arg6[%c0_7, %c0_8] : memref<928x128xf32, #tpu.memory_space<vmem>>, vector<128x128xf32>
    %cst_9 = arith.constant dense<0.000000e+00> : vector<8x128xf32>
    %25 = tpu.matmul %23, %24, %cst_9 {dimension_numbers = #tpu.dot_dimension_numbers<[1], [0], [0], [1], [0, 0, 1, 1], [], []>} : vector<8x128xf32>, vector<128x128xf32>, vector<8x128xf32> -> vector<8x128xf32>
    %c128 = arith.constant 128 : index
    %c0_10 = arith.constant 0 : index
    %26 = vector.load %arg6[%c128, %c0_10] : memref<928x128xf32, #tpu.memory_space<vmem>>, vector<128x128xf32>
    %cst_11 = arith.constant dense<0.000000e+00> : vector<8x128xf32>
    %27 = tpu.matmul %25, %26, %cst_11 {dimension_numbers = #tpu.dot_dimension_numbers<[1], [0], [0], [1], [0, 0, 1, 1], [], []>} : vector<8x128xf32>, vector<128x128xf32>, vector<8x128xf32> -> vector<8x128xf32>
    %c0_12 = arith.constant 0 : index
    %c0_13 = arith.constant 0 : index
    %28 = vector.load %arg7[%c0_12, %c0_13] : memref<8x128xf32, #tpu.memory_space<vmem>>, vector<1x128xf32>
    %29 = vector.broadcast %28 : vector<1x128xf32> to vector<8x128xf32>
    %30 = arith.addf %27, %29 : vector<8x128xf32>
    %cst_14 = arith.constant 0.000000e+00 : f32
    %31 = vector.broadcast %cst_14 : f32 to vector<8x128xf32>
    %32 = arith.maximumf %30, %31 : vector<8x128xf32>
    %c0_15 = arith.constant 0 : index
    %c0_16 = arith.constant 0 : index
    %33 = vector.load %arg1[%c0_15, %c0_16] : memref<64x16xf32, #tpu.memory_space<vmem>>, vector<64x16xf32>
    %c256 = arith.constant 256 : index
    %c0_17 = arith.constant 0 : index
    %34 = vector.load %arg6[%c256, %c0_17] : memref<928x128xf32, #tpu.memory_space<vmem>>, vector<16x128xf32>
    %cst_18 = arith.constant dense<0.000000e+00> : vector<64x128xf32>
    %35 = tpu.matmul %33, %34, %cst_18 {dimension_numbers = #tpu.dot_dimension_numbers<[1], [0], [0], [1], [0, 0, 1, 1], [], []>} : vector<64x16xf32>, vector<16x128xf32>, vector<64x128xf32> -> vector<64x128xf32>
    %36 = tpu.iota {dimensions = array<i32: 1>} : vector<128x64xi32>
    %c0_19 = arith.constant 0 : index
    %c0_20 = arith.constant 0 : index
    %37 = vector.load %arg3[%c0_19, %c0_20] : memref<128x1xi32, #tpu.memory_space<vmem>>, vector<128x1xi32>
    %38 = vector.broadcast %37 : vector<128x1xi32> to vector<128x64xi32>
    %39 = arith.cmpi eq, %36, %38 : vector<128x64xi32>
    %cst_21 = arith.constant 1.000000e+00 : f32
    %cst_22 = arith.constant 0.000000e+00 : f32
    %40 = vector.broadcast %cst_21 : f32 to vector<128x64xf32>
    %41 = vector.broadcast %cst_22 : f32 to vector<128x64xf32>
    %42 = arith.select %39, %40, %41 : vector<128x64xi1>, vector<128x64xf32>
    %c0_23 = arith.constant 0 : index
    %c0_24 = arith.constant 0 : index
    %43 = vector.load %arg2[%c0_23, %c0_24] : memref<128x8xf32, #tpu.memory_space<vmem>>, vector<128x8xf32>
    %c272 = arith.constant 272 : index
    %c0_25 = arith.constant 0 : index
    %44 = vector.load %arg6[%c272, %c0_25] : memref<928x128xf32, #tpu.memory_space<vmem>>, vector<8x128xf32>
    %cst_26 = arith.constant dense<0.000000e+00> : vector<128x128xf32>
    %45 = tpu.matmul %43, %44, %cst_26 {dimension_numbers = #tpu.dot_dimension_numbers<[1], [0], [0], [1], [0, 0, 1, 1], [], []>} : vector<128x8xf32>, vector<8x128xf32>, vector<128x128xf32> -> vector<128x128xf32>
    %cst_27 = arith.constant dense<0.000000e+00> : vector<128x128xf32>
    %46 = tpu.matmul %42, %35, %cst_27 {dimension_numbers = #tpu.dot_dimension_numbers<[1], [0], [0], [1], [0, 0, 1, 1], [], []>} : vector<128x64xf32>, vector<64x128xf32>, vector<128x128xf32> -> vector<128x128xf32>
    %47 = arith.addf %46, %45 : vector<128x128xf32>
    %c1 = arith.constant 1 : index
    %c0_28 = arith.constant 0 : index
    %48 = vector.load %arg7[%c1, %c0_28] : memref<8x128xf32, #tpu.memory_space<vmem>>, vector<1x128xf32>
    %49 = vector.broadcast %48 : vector<1x128xf32> to vector<128x128xf32>
    %50 = arith.addf %47, %49 : vector<128x128xf32>
    %cst_29 = arith.constant 0.000000e+00 : f32
    %51 = vector.broadcast %cst_29 : f32 to vector<128x128xf32>
    %52 = arith.maximumf %50, %51 : vector<128x128xf32>
    %53 = tpu.iota {dimensions = array<i32: 0>} : vector<64x128xi32>
    %c0_30 = arith.constant 0 : index
    %c0_31 = arith.constant 0 : index
    %54 = vector.load %arg4[%c0_30, %c0_31] : memref<1x128xi32, #tpu.memory_space<vmem>>, vector<1x128xi32>
    %55 = vector.broadcast %54 : vector<1x128xi32> to vector<64x128xi32>
    %56 = arith.cmpi eq, %53, %55 : vector<64x128xi32>
    %cst_32 = arith.constant 1.000000e+00 : f32
    %cst_33 = arith.constant 0.000000e+00 : f32
    %57 = vector.broadcast %cst_32 : f32 to vector<64x128xf32>
    %58 = vector.broadcast %cst_33 : f32 to vector<64x128xf32>
    %59 = arith.select %56, %57, %58 : vector<64x128xi1>, vector<64x128xf32>
    %cst_34 = arith.constant dense<0.000000e+00> : vector<64x128xf32>
    %60 = tpu.matmul %59, %52, %cst_34 {dimension_numbers = #tpu.dot_dimension_numbers<[1], [0], [0], [1], [0, 0, 1, 1], [], []>} : vector<64x128xf32>, vector<128x128xf32>, vector<64x128xf32> -> vector<64x128xf32>
    %c288 = arith.constant 288 : index
    %c0_35 = arith.constant 0 : index
    %61 = vector.load %arg6[%c288, %c0_35] : memref<928x128xf32, #tpu.memory_space<vmem>>, vector<128x128xf32>
    %cst_36 = arith.constant dense<0.000000e+00> : vector<64x128xf32>
    %62 = tpu.matmul %60, %61, %cst_36 {dimension_numbers = #tpu.dot_dimension_numbers<[1], [0], [0], [1], [0, 0, 1, 1], [], []>} : vector<64x128xf32>, vector<128x128xf32>, vector<64x128xf32> -> vector<64x128xf32>
    %c2 = arith.constant 2 : index
    %c0_37 = arith.constant 0 : index
    %63 = vector.load %arg7[%c2, %c0_37] : memref<8x128xf32, #tpu.memory_space<vmem>>, vector<1x128xf32>
    %64 = vector.broadcast %63 : vector<1x128xf32> to vector<64x128xf32>
    %65 = arith.addf %62, %64 : vector<64x128xf32>
    %cst_38 = arith.constant 0.000000e+00 : f32
    %66 = vector.broadcast %cst_38 : f32 to vector<64x128xf32>
    %67 = arith.maximumf %65, %66 : vector<64x128xf32>
    %68 = tpu.iota {dimensions = array<i32: 0>} : vector<8x64xi32>
    %c0_39 = arith.constant 0 : index
    %c0_40 = arith.constant 0 : index
    %69 = vector.load %arg5[%c0_39, %c0_40] : memref<1x64xi32, #tpu.memory_space<vmem>>, vector<1x64xi32>
    %70 = vector.broadcast %69 : vector<1x64xi32> to vector<8x64xi32>
    %71 = arith.cmpi eq, %68, %70 : vector<8x64xi32>
    %cst_41 = arith.constant 1.000000e+00 : f32
    %cst_42 = arith.constant 0.000000e+00 : f32
    %72 = vector.broadcast %cst_41 : f32 to vector<8x64xf32>
    %73 = vector.broadcast %cst_42 : f32 to vector<8x64xf32>
    %74 = arith.select %71, %72, %73 : vector<8x64xi1>, vector<8x64xf32>
    %cst_43 = arith.constant dense<0.000000e+00> : vector<8xf32>
    %75 = vector.multi_reduction <add>, %74, %cst_43 [1] : vector<8x64xf32> to vector<8xf32>
    %76 = vector.shape_cast %75 : vector<8xf32> to vector<8x1xf32>
    %cst_44 = arith.constant 1.000000e+00 : f32
    %77 = vector.broadcast %cst_44 : f32 to vector<8x1xf32>
    %78 = arith.maximumf %76, %77 : vector<8x1xf32>
    %79 = vector.broadcast %78 : vector<8x1xf32> to vector<8x64xf32>
    %80 = arith.divf %74, %79 : vector<8x64xf32>
    %cst_45 = arith.constant dense<0.000000e+00> : vector<8x128xf32>
    %81 = tpu.matmul %80, %67, %cst_45 {dimension_numbers = #tpu.dot_dimension_numbers<[1], [0], [0], [1], [0, 0, 1, 1], [], []>} : vector<8x64xf32>, vector<64x128xf32>, vector<8x128xf32> -> vector<8x128xf32>
    %c416 = arith.constant 416 : index
    %c0_46 = arith.constant 0 : index
    %82 = vector.load %arg6[%c416, %c0_46] : memref<928x128xf32, #tpu.memory_space<vmem>>, vector<128x128xf32>
    %cst_47 = arith.constant dense<0.000000e+00> : vector<8x128xf32>
    %83 = tpu.matmul %32, %82, %cst_47 {dimension_numbers = #tpu.dot_dimension_numbers<[1], [0], [0], [1], [0, 0, 1, 1], [], []>} : vector<8x128xf32>, vector<128x128xf32>, vector<8x128xf32> -> vector<8x128xf32>
    %c544 = arith.constant 544 : index
    %c0_48 = arith.constant 0 : index
    %84 = vector.load %arg6[%c544, %c0_48] : memref<928x128xf32, #tpu.memory_space<vmem>>, vector<128x128xf32>
    %cst_49 = arith.constant dense<0.000000e+00> : vector<8x128xf32>
    %85 = tpu.matmul %81, %84, %cst_49 {dimension_numbers = #tpu.dot_dimension_numbers<[1], [0], [0], [1], [0, 0, 1, 1], [], []>} : vector<8x128xf32>, vector<128x128xf32>, vector<8x128xf32> -> vector<8x128xf32>
    %86 = arith.addf %83, %85 : vector<8x128xf32>
    %c3 = arith.constant 3 : index
    %c0_50 = arith.constant 0 : index
    %87 = vector.load %arg7[%c3, %c0_50] : memref<8x128xf32, #tpu.memory_space<vmem>>, vector<1x128xf32>
    %88 = vector.broadcast %87 : vector<1x128xf32> to vector<8x128xf32>
    %89 = arith.addf %86, %88 : vector<8x128xf32>
    %cst_51 = arith.constant 0.000000e+00 : f32
    %90 = vector.broadcast %cst_51 : f32 to vector<8x128xf32>
    %91 = arith.maximumf %89, %90 : vector<8x128xf32>
    %c672 = arith.constant 672 : index
    %c0_52 = arith.constant 0 : index
    %92 = vector.load %arg6[%c672, %c0_52] : memref<928x128xf32, #tpu.memory_space<vmem>>, vector<128x128xf32>
    %cst_53 = arith.constant dense<0.000000e+00> : vector<8x128xf32>
    %93 = tpu.matmul %91, %92, %cst_53 {dimension_numbers = #tpu.dot_dimension_numbers<[1], [0], [0], [1], [0, 0, 1, 1], [], []>} : vector<8x128xf32>, vector<128x128xf32>, vector<8x128xf32> -> vector<8x128xf32>
    %c4 = arith.constant 4 : index
    %c0_54 = arith.constant 0 : index
    %94 = vector.load %arg7[%c4, %c0_54] : memref<8x128xf32, #tpu.memory_space<vmem>>, vector<1x128xf32>
    %95 = vector.broadcast %94 : vector<1x128xf32> to vector<8x128xf32>
    %96 = arith.addf %93, %95 : vector<8x128xf32>
    %cst_55 = arith.constant 0.000000e+00 : f32
    %97 = vector.broadcast %cst_55 : f32 to vector<8x128xf32>
    %98 = arith.maximumf %96, %97 : vector<8x128xf32>
    %c800 = arith.constant 800 : index
    %c0_56 = arith.constant 0 : index
    %99 = vector.load %arg6[%c800, %c0_56] : memref<928x128xf32, #tpu.memory_space<vmem>>, vector<128x128xf32>
    %cst_57 = arith.constant dense<0.000000e+00> : vector<8x128xf32>
    %100 = tpu.matmul %98, %99, %cst_57 {dimension_numbers = #tpu.dot_dimension_numbers<[1], [0], [0], [1], [0, 0, 1, 1], [], []>} : vector<8x128xf32>, vector<128x128xf32>, vector<8x128xf32> -> vector<8x128xf32>
    %c5 = arith.constant 5 : index
    %c0_58 = arith.constant 0 : index
    %101 = vector.load %arg7[%c5, %c0_58] : memref<8x128xf32, #tpu.memory_space<vmem>>, vector<1x128xf32>
    %102 = vector.broadcast %101 : vector<1x128xf32> to vector<8x128xf32>
    %103 = arith.addf %100, %102 : vector<8x128xf32>
    %c0_59 = arith.constant 0 : index
    %c0_60 = arith.constant 0 : index
    %104 = vector.load %arg8[%c0_59, %c0_60] : memref<8x128xf32, #tpu.memory_space<vmem>>, vector<8x128xf32>
    tpu.vector_store %arg8[%c0_59, %c0_60], %103 {strides = array<i32>} : memref<8x128xf32, #tpu.memory_space<vmem>>, vector<8x128xf32>,
    return
  }
}

</mosaic_0001>

<llo_original>
// kernel: forward.1
$region0: #{forward.1}
  #allocation0 [shape = 'u32[]', space=smem, size = 0x4, offset = 0x4, fixed_abs, tag = 'smem constant byte address 0x4 - core index']
  #allocation1 [shape = 'u32[144,128]{1,0:T(1,128)}', space=vmem, size = 0x12000, scoped, tag = 'internal scratch']
  %s0 = inlined_call_operand.vmem [shape: s32[128,1], index: 0, kind: input, shape index: {}]
  %s1 = inlined_call_operand.vmem [shape: f32[64,16], index: 1, kind: input, shape index: {}]
  %s2 = inlined_call_operand.vmem [shape: f32[128,8], index: 2, kind: input, shape index: {}]
  %s3 = inlined_call_operand.vmem [shape: s32[128,1], index: 3, kind: input, shape index: {}]
  %s4 = inlined_call_operand.vmem [shape: s32[1,128], index: 4, kind: input, shape index: {}]
  %s5 = inlined_call_operand.vmem [shape: s32[1,64], index: 5, kind: input, shape index: {}]
  %s6 = inlined_call_operand.hbm [shape: f32[928,128], index: 6, kind: input, shape index: {}]
  %s7 = inlined_call_operand.vmem [shape: f32[8,128], index: 7, kind: input, shape index: {}]
  %s8 = inlined_call_operand.vmem [shape: f32[8,128], index: 8, kind: output, shape index: {}]
  %s9 = sld [smem:[#allocation0]]
  $region46: #{forward.1} parent=0
    _
  %s11 = ssub.s32 1, %s9
  %s12 = scalar_select 0, %s11, %s9
  $region1: #{forward.1} parent=0
    #allocation2 [shape = 'u8[475136]{0}', space=vmem, size = 0x74000, scoped, tag = 'input window, operand 6, single buffered']
    #allocation3 [shape = 's32[1]{0}', space=sflag, size = 0x4, scoped, tag = 'scoped memory for forward.1']
    %13 = vsyncpa [#allocation3], 0
    // Predicated region
    $region2: #{forward.1} parent=1 // pred_check
      _
    $region3: #{forward.1} parent=1 // pred_check_branch
      %15 = sbr.rel (0) target = $region5
    $region4: #{forward.1} parent=1 // pred_region
      _
    $region5: #{forward.1} parent=1 // pred_fallthru
      _
    // Predicated region
    $region6: #{forward.1} parent=1 // pred_check
      _
    $region7: #{forward.1} parent=1 // pred_check_branch
      %17 = sbr.rel (0) target = $region9
    $region8: #{forward.1} parent=1 // pred_region
      _
    $region9: #{forward.1} parent=1 // pred_fallthru
      _
    // Predicated region
    $region10: #{forward.1} parent=1 // pred_check
      _
    $region11: #{forward.1} parent=1 // pred_check_branch
      %19 = sbr.rel (0) target = $region13
    $region12: #{forward.1} parent=1 // pred_region
      _
    $region13: #{forward.1} parent=1 // pred_fallthru
      _
    // Predicated region
    $region14: #{forward.1} parent=1 // pred_check
      _
    $region15: #{forward.1} parent=1 // pred_check_branch
      %21 = sbr.rel (0) target = $region17
    $region16: #{forward.1} parent=1 // pred_region
      _
    $region17: #{forward.1} parent=1 // pred_fallthru
      _
    // Predicated region
    $region18: #{forward.1} parent=1 // pred_check
      _
    $region19: #{forward.1} parent=1 // pred_check_branch
      %23 = sbr.rel (0) target = $region21
    $region20: #{forward.1} parent=1 // pred_region
      _
    $region21: #{forward.1} parent=1 // pred_fallthru
      _
    // Predicated region
    $region22: #{forward.1} parent=1 // pred_check
      _
    $region23: #{forward.1} parent=1 // pred_check_branch
      %25 = sbr.rel (0) target = $region25
    $region24: #{forward.1} parent=1 // pred_region
      _
    $region25: #{forward.1} parent=1 // pred_fallthru
      _
    // Predicated region
    $region26: #{forward.1} parent=1 // pred_check
      _
    $region27: #{forward.1} parent=1 // pred_check_branch
      %27 = sbr.rel (0) target = $region29
    $region28: #{forward.1} parent=1 // pred_region
      %s29 = ssub.s32 14848, 14848
      %30 = vsyncadd [#allocation3], %s29
      %s31 = sshll.u32 [#allocation2], 4
      %s32 = int_to_ptr.vmem [resolvable:$true] %s31
      %37 = dma.hbm_to_vmem [thread:$0]  %s6, 14848, %s32, [#allocation3], 128, 128, 8
    $region29: #{forward.1} parent=1 // pred_fallthru
      _
    // Predicated region
    $region30: #{forward.1} parent=1 // pred_check
      _
    $region31: #{forward.1} parent=1 // pred_check_branch
      %39 = sbr.rel (0) target = $region33
    $region32: #{forward.1} parent=1 // pred_region
      _
    $region33: #{forward.1} parent=1 // pred_fallthru
      _
    // Predicated region
    $region34: #{forward.1} parent=1 // pred_check
      _
    $region35: #{forward.1} parent=1 // pred_check_branch
      %41 = sbr.rel (0) target = $region37
    $region36: #{forward.1} parent=1 // pred_region
      %42 = dma.done [#allocation3], 14848
    $region37: #{forward.1} parent=1 // pred_fallthru
      _
    %v43 = vlaneseq
    %v44 = vand.u32 %v43, 127
    %v45 = vld [vmem:[%s0] sm:$0xff]
    %v46 = vld [vmem:[%s0 + $0x8] sm:$0xff]
    %v47 = vld [vmem:[%s0 + $0x10] sm:$0xff]
    %v48 = vld [vmem:[%s0 + $0x18] sm:$0xff]
    %v49 = vld [vmem:[%s0 + $0x20] sm:$0xff]
    %v50 = vld [vmem:[%s0 + $0x28] sm:$0xff]
    %v51 = vld [vmem:[%s0 + $0x30] sm:$0xff]
    %v52 = vld [vmem:[%s0 + $0x38] sm:$0xff]
    %v53 = vld [vmem:[%s0 + $0x40] sm:$0xff]
    %v54 = vld [vmem:[%s0 + $0x48] sm:$0xff]
    %v55 = vld [vmem:[%s0 + $0x50] sm:$0xff]
    %v56 = vld [vmem:[%s0 + $0x58] sm:$0xff]
    %v57 = vld [vmem:[%s0 + $0x60] sm:$0xff]
    %v58 = vld [vmem:[%s0 + $0x68] sm:$0xff]
    %v59 = vld [vmem:[%s0 + $0x70] sm:$0xff]
    %v60 = vld [vmem:[%s0 + $0x78] sm:$0xff]
    %61 = vset.pattern.permute.xlu0 0
    %62 = vperm.xlu0 %61, %v45
    %v63 = vpop.permute.xlu0 %62
    %64 = vset.pattern.permute.xlu0 0
    %65 = vperm.xlu0 %64, %v46
    %v66 = vpop.permute.xlu0 %65
    %67 = vset.pattern.permute.xlu0 0
    %68 = vperm.xlu0 %67, %v47
    %v69 = vpop.permute.xlu0 %68
    %70 = vset.pattern.permute.xlu0 0
    %71 = vperm.xlu0 %70, %v48
    %v72 = vpop.permute.xlu0 %71
    %73 = vset.pattern.permute.xlu0 0
    %74 = vperm.xlu0 %73, %v49
    %v75 = vpop.permute.xlu0 %74
    %76 = vset.pattern.permute.xlu0 0
    %77 = vperm.xlu0 %76, %v50
    %v78 = vpop.permute.xlu0 %77
    %79 = vset.pattern.permute.xlu0 0
    %80 = vperm.xlu0 %79, %v51
    %v81 = vpop.permute.xlu0 %80
    %82 = vset.pattern.permute.xlu0 0
    %83 = vperm.xlu0 %82, %v52
    %v84 = vpop.permute.xlu0 %83
    %85 = vset.pattern.permute.xlu0 0
    %86 = vperm.xlu0 %85, %v53
    %v87 = vpop.permute.xlu0 %86
    %88 = vset.pattern.permute.xlu0 0
    %89 = vperm.xlu0 %88, %v54
    %v90 = vpop.permute.xlu0 %89
    %91 = vset.pattern.permute.xlu0 0
    %92 = vperm.xlu0 %91, %v55
    %v93 = vpop.permute.xlu0 %92
    %94 = vset.pattern.permute.xlu0 0
    %95 = vperm.xlu0 %94, %v56
    %v96 = vpop.permute.xlu0 %95
    %97 = vset.pattern.permute.xlu0 0
    %98 = vperm.xlu0 %97, %v57
    %v99 = vpop.permute.xlu0 %98
    %100 = vset.pattern.permute.xlu0 0
    %101 = vperm.xlu0 %100, %v58
    %v102 = vpop.permute.xlu0 %101
    %103 = vset.pattern.permute.xlu0 0
    %104 = vperm.xlu0 %103, %v59
    %v105 = vpop.permute.xlu0 %104
    %106 = vset.pattern.permute.xlu0 0
    %107 = vperm.xlu0 %106, %v60
    %v108 = vpop.permute.xlu0 %107
    %vm109 = vcmp.eq.s32.totalorder %v44, %v63
    %vm110 = vcmp.eq.s32.totalorder %v44, %v66
    %vm111 = vcmp.eq.s32.totalorder %v44, %v69
    %vm112 = vcmp.eq.s32.totalorder %v44, %v72
    %vm113 = vcmp.eq.s32.totalorder %v44, %v75
    %vm114 = vcmp.eq.s32.totalorder %v44, %v78
    %vm115 = vcmp.eq.s32.totalorder %v44, %v81
    %vm116 = vcmp.eq.s32.totalorder %v44, %v84
    %vm117 = vcmp.eq.s32.totalorder %v44, %v87
    %vm118 = vcmp.eq.s32.totalorder %v44, %v90
    %vm119 = vcmp.eq.s32.totalorder %v44, %v93
    %vm120 = vcmp.eq.s32.totalorder %v44, %v96
    %vm121 = vcmp.eq.s32.totalorder %v44, %v99
    %vm122 = vcmp.eq.s32.totalorder %v44, %v102
    %vm123 = vcmp.eq.s32.totalorder %v44, %v105
    %vm124 = vcmp.eq.s32.totalorder %v44, %v108
    %v125 = vsel %vm109, 1.0, 0.0
    %v126 = vsel %vm110, 1.0, 0.0
    %v127 = vsel %vm111, 1.0, 0.0
    %v128 = vsel %vm112, 1.0, 0.0
    %v129 = vsel %vm113, 1.0, 0.0
    %v130 = vsel %vm114, 1.0, 0.0
    %v131 = vsel %vm115, 1.0, 0.0
    %v132 = vsel %vm116, 1.0, 0.0
    %v133 = vsel %vm117, 1.0, 0.0
    %v134 = vsel %vm118, 1.0, 0.0
    %v135 = vsel %vm119, 1.0, 0.0
    %v136 = vsel %vm120, 1.0, 0.0
    %v137 = vsel %vm121, 1.0, 0.0
    %v138 = vsel %vm122, 1.0, 0.0
    %v139 = vsel %vm123, 1.0, 0.0
    %v140 = vsel %vm124, 1.0, 0.0
    %v141 = vlaneseq
    %v142 = vshrl.u32 %v141, 7
    %v143 = vmul.u32 %v142, 16
    %vm144 = vcmp.ge.s32.totalorder %v44, %v143
    %v145 = vadd.s32 %v142, 1
    %v146 = vmul.u32 %v145, 16
    %vm147 = vcmp.lt.s32.totalorder %v44, %v146
    %vm148 = vmand %vm144, %vm147
    %v149 = vsel %vm148, 1.0, 0.0
    %150 = vmatprep.subr.mxu0 0.0
    %151 = vmatpush1.msra.mxu0 %v125
    %152 = vmatprep.subr.mxu0 0.0
    %153 = vmatpush1.msra.mxu0 %v126
    %154 = vmatprep.subr.mxu0 0.0
    %155 = vmatpush1.msra.mxu0 %v127
    %156 = vmatprep.subr.mxu0 0.0
    %157 = vmatpush1.msra.mxu0 %v128
    %158 = vmatprep.subr.mxu0 0.0
    %159 = vmatpush1.msra.mxu0 %v129
    %160 = vmatprep.subr.mxu0 0.0
    %161 = vmatpush1.msra.mxu0 %v130
    %162 = vmatprep.subr.mxu0 0.0
    %163 = vmatpush1.msra.mxu0 %v131
    %164 = vmatprep.subr.mxu0 0.0
    %165 = vmatpush1.msra.mxu0 %v132
    %166 = vmatprep.subr.mxu0 0.0
    %167 = vmatpush1.msra.mxu0 %v133
    %168 = vmatprep.subr.mxu0 0.0
    %169 = vmatpush1.msra.mxu0 %v134
    %170 = vmatprep.subr.mxu0 0.0
    %171 = vmatpush1.msra.mxu0 %v135
    %172 = vmatprep.subr.mxu0 0.0
    %173 = vmatpush1.msra.mxu0 %v136
    %174 = vmatprep.subr.mxu0 0.0
    %175 = vmatpush1.msra.mxu0 %v137
    %176 = vmatprep.subr.mxu0 0.0
    %177 = vmatpush1.msra.mxu0 %v138
    %178 = vmatprep.subr.mxu0 0.0
    %179 = vmatpush1.msra.mxu0 %v139
    %180 = vmatprep.subr.mxu0 0.0
    %181 = vmatpush1.msra.mxu0 %v140
    %182 = vmatprep.subr.mxu0 0.0
    %183 = vmatpush1.msra.mxu0 0.0
    %184 = vmatprep.subr.mxu0 0.0
    %185 = vmatpush1.msra.mxu0 0.0
    %186 = vmatprep.subr.mxu0 0.0
    %187 = vmatpush1.msra.mxu0 0.0
    %188 = vmatprep.subr.mxu0 0.0
    %189 = vmatpush1.msra.mxu0 0.0
    %190 = vmatprep.subr.mxu0 0.0
    %191 = vmatpush1.msra.mxu0 0.0
    %192 = vmatprep.subr.mxu0 0.0
    %193 = vmatpush1.msra.mxu0 0.0
    %194 = vmatprep.subr.mxu0 0.0
    %195 = vmatpush1.msra.mxu0 0.0
    %196 = vmatprep.subr.mxu0 0.0
    %197 = vmatpush1.msra.mxu0 0.0
    %198 = vmatprep.subr.mxu0 0.0
    %199 = vmatpush1.msra.mxu0 0.0
    %200 = vmatprep.subr.mxu0 0.0
    %201 = vmatpush1.msra.mxu0 0.0
    %202 = vmatprep.subr.mxu0 0.0
    %203 = vmatpush1.msra.mxu0 0.0
    %204 = vmatprep.subr.mxu0 0.0
    %205 = vmatpush1.msra.mxu0 0.0
    %206 = vmatprep.subr.mxu0 0.0
    %207 = vmatpush1.msra.mxu0 0.0
    %208 = vmatprep.subr.mxu0 0.0
    %209 = vmatpush1.msra.mxu0 0.0
    %210 = vmatprep.subr.mxu0 0.0
    %211 = vmatpush1.msra.mxu0 0.0
    %212 = vmatprep.subr.mxu0 0.0
    %213 = vmatpush1.msra.mxu0 0.0
    %214 = vmatprep.mubr.f32.mxu0 0.0
    %215 = vmatmul.mubr.f32.gmra.mrb[0].mxu0 %v149
    %v216 = vpop.f32.mrb[0].mxu0
    %v217 = vadd.f32 0.0, %v216
    %v218 = vpop.f32.mrb[0].mxu0
    %219 = vdwg.mxu0
    %v220 = vmul.f32 %v217, 0.0625
    %v221 = vld [vmem:[#allocation2] sm:$0xff]
    %v222 = vld [vmem:[#allocation2 + $0x8] sm:$0xff]
    %v223 = vld [vmem:[#allocation2 + $0x10] sm:$0xff]
    %v224 = vld [vmem:[#allocation2 + $0x18] sm:$0xff]
    %v225 = vld [vmem:[#allocation2 + $0x20] sm:$0xff]
    %v226 = vld [vmem:[#allocation2 + $0x28] sm:$0xff]
    %v227 = vld [vmem:[#allocation2 + $0x30] sm:$0xff]
    %v228 = vld [vmem:[#allocation2 + $0x38] sm:$0xff]
    %v229 = vld [vmem:[#allocation2 + $0x40] sm:$0xff]
    %v230 = vld [vmem:[#allocation2 + $0x48] sm:$0xff]
    %v231 = vld [vmem:[#allocation2 + $0x50] sm:$0xff]
    %v232 = vld [vmem:[#allocation2 + $0x58] sm:$0xff]
    %v233 = vld [vmem:[#allocation2 + $0x60] sm:$0xff]
    %v234 = vld [vmem:[#allocation2 + $0x68] sm:$0xff]
    %v235 = vld [vmem:[#allocation2 + $0x70] sm:$0xff]
    %v236 = vld [vmem:[#allocation2 + $0x78] sm:$0xff]
    %237 = vmatprep.subr.mxu0 0.0
    %238 = vmatpush1.msra.mxu0 %v221
    %239 = vmatprep.subr.mxu0 0.0
    %240 = vmatpush1.msra.mxu0 %v222
    %241 = vmatprep.subr.mxu0 0.0
    %242 = vmatpush1.msra.mxu0 %v223
    %243 = vmatprep.subr.mxu0 0.0
    %244 = vmatpush1.msra.mxu0 %v224
    %245 = vmatprep.subr.mxu0 0.0
    %246 = vmatpush1.msra.mxu0 %v225
    %247 = vmatprep.subr.mxu0 0.0
    %248 = vmatpush1.msra.mxu0 %v226
    %249 = vmatprep.subr.mxu0 0.0
    %250 = vmatpush1.msra.mxu0 %v227
    %251 = vmatprep.subr.mxu0 0.0
    %252 = vmatpush1.msra.mxu0 %v228
    %253 = vmatprep.subr.mxu0 0.0
    %254 = vmatpush1.msra.mxu0 %v229
    %255 = vmatprep.subr.mxu0 0.0
    %256 = vmatpush1.msra.mxu0 %v230
    %257 = vmatprep.subr.mxu0 0.0
    %258 = vmatpush1.msra.mxu0 %v231
    %259 = vmatprep.subr.mxu0 0.0
    %260 = vmatpush1.msra.mxu0 %v232
    %261 = vmatprep.subr.mxu0 0.0
    %262 = vmatpush1.msra.mxu0 %v233
    %263 = vmatprep.subr.mxu0 0.0
    %264 = vmatpush1.msra.mxu0 %v234
    %265 = vmatprep.subr.mxu0 0.0
    %266 = vmatpush1.msra.mxu0 %v235
    %267 = vmatprep.subr.mxu0 0.0
    %268 = vmatpush1.msra.mxu0 %v236
    %269 = vmatprep.subr.mxu0 0.0
    %270 = vmatpush1.msra.mxu0 0.0
    %271 = vmatprep.subr.mxu0 0.0
    %272 = vmatpush1.msra.mxu0 0.0
    %273 = vmatprep.subr.mxu0 0.0
    %274 = vmatpush1.msra.mxu0 0.0
    %275 = vmatprep.subr.mxu0 0.0
    %276 = vmatpush1.msra.mxu0 0.0
    %277 = vmatprep.subr.mxu0 0.0
    %278 = vmatpush1.msra.mxu0 0.0
    %279 = vmatprep.subr.mxu0 0.0
    %280 = vmatpush1.msra.mxu0 0.0
    %281 = vmatprep.subr.mxu0 0.0
    %282 = vmatpush1.msra.mxu0 0.0
    %283 = vmatprep.subr.mxu0 0.0
    %284 = vmatpush1.msra.mxu0 0.0
    %285 = vmatprep.subr.mxu0 0.0
    %286 = vmatpush1.msra.mxu0 0.0
    %287 = vmatprep.subr.mxu0 0.0
    %288 = vmatpush1.msra.mxu0 0.0
    %289 = vmatprep.subr.mxu0 0.0
    %290 = vmatpush1.msra.mxu0 0.0
    %291 = vmatprep.subr.mxu0 0.0
    %292 = vmatpush1.msra.mxu0 0.0
    %293 = vmatprep.subr.mxu0 0.0
    %294 = vmatpush1.msra.mxu0 0.0
    %295 = vmatprep.subr.mxu0 0.0
    %296 = vmatpush1.msra.mxu0 0.0
    %297 = vmatprep.subr.mxu0 0.0
    %298 = vmatpush1.msra.mxu0 0.0
    %299 = vmatprep.subr.mxu0 0.0
    %300 = vmatpush1.msra.mxu0 0.0
    %301 = vmatprep.mubr.f32.mxu0 0.0
    %302 = vmatmul.mubr.f32.gmra.mrb[0].mxu0 %v220
    %v303 = vpop.f32.mrb[0].mxu0
    %v304 = vadd.f32 0.0, %v303
    %v305 = vpop.f32.mrb[0].mxu0
    %306 = vdwg.mxu0
    %v307 = vld [vmem:[#allocation2 + $0x80] sm:$0xff]
    %v308 = vld [vmem:[#allocation2 + $0x88] sm:$0xff]
    %v309 = vld [vmem:[#allocation2 + $0x90] sm:$0xff]
    %v310 = vld [vmem:[#allocation2 + $0x98] sm:$0xff]
    %v311 = vld [vmem:[#allocation2 + $0xa0] sm:$0xff]
    %v312 = vld [vmem:[#allocation2 + $0xa8] sm:$0xff]
    %v313 = vld [vmem:[#allocation2 + $0xb0] sm:$0xff]
    %v314 = vld [vmem:[#allocation2 + $0xb8] sm:$0xff]
    %v315 = vld [vmem:[#allocation2 + $0xc0] sm:$0xff]
    %v316 = vld [vmem:[#allocation2 + $0xc8] sm:$0xff]
    %v317 = vld [vmem:[#allocation2 + $0xd0] sm:$0xff]
    %v318 = vld [vmem:[#allocation2 + $0xd8] sm:$0xff]
    %v319 = vld [vmem:[#allocation2 + $0xe0] sm:$0xff]
    %v320 = vld [vmem:[#allocation2 + $0xe8] sm:$0xff]
    %v321 = vld [vmem:[#allocation2 + $0xf0] sm:$0xff]
    %v322 = vld [vmem:[#allocation2 + $0xf8] sm:$0xff]
    %v323 = vld [vmem:[%s7] sm:$0x1]
    %v324 = vlaneseq
    %v325 = vshrl.u32 %v324, 7
    %v326 = vsub.s32 0, %v325
    %v327 = vrot.slane %v323, %v326
    %328 = vmatprep.subr.mxu0 0.0
    %329 = vmatpush1.msra.mxu0 %v307
    %330 = vmatprep.subr.mxu0 0.0
    %331 = vmatpush1.msra.mxu0 %v308
    %332 = vmatprep.subr.mxu0 0.0
    %333 = vmatpush1.msra.mxu0 %v309
    %334 = vmatprep.subr.mxu0 0.0
    %335 = vmatpush1.msra.mxu0 %v310
    %336 = vmatprep.subr.mxu0 0.0
    %337 = vmatpush1.msra.mxu0 %v311
    %338 = vmatprep.subr.mxu0 0.0
    %339 = vmatpush1.msra.mxu0 %v312
    %340 = vmatprep.subr.mxu0 0.0
    %341 = vmatpush1.msra.mxu0 %v313
    %342 = vmatprep.subr.mxu0 0.0
    %343 = vmatpush1.msra.mxu0 %v314
    %344 = vmatprep.subr.mxu0 0.0
    %345 = vmatpush1.msra.mxu0 %v315
    %346 = vmatprep.subr.mxu0 0.0
    %347 = vmatpush1.msra.mxu0 %v316
    %348 = vmatprep.subr.mxu0 0.0
    %349 = vmatpush1.msra.mxu0 %v317
    %350 = vmatprep.subr.mxu0 0.0
    %351 = vmatpush1.msra.mxu0 %v318
    %352 = vmatprep.subr.mxu0 0.0
    %353 = vmatpush1.msra.mxu0 %v319
    %354 = vmatprep.subr.mxu0 0.0
    %355 = vmatpush1.msra.mxu0 %v320
    %356 = vmatprep.subr.mxu0 0.0
    %357 = vmatpush1.msra.mxu0 %v321
    %358 = vmatprep.subr.mxu0 0.0
    %359 = vmatpush1.msra.mxu0 %v322
    %360 = vmatprep.subr.mxu0 0.0
    %361 = vmatpush1.msra.mxu0 0.0
    %362 = vmatprep.subr.mxu0 0.0
    %363 = vmatpush1.msra.mxu0 0.0
    %364 = vmatprep.subr.mxu0 0.0
    %365 = vmatpush1.msra.mxu0 0.0
    %366 = vmatprep.subr.mxu0 0.0
    %367 = vmatpush1.msra.mxu0 0.0
    %368 = vmatprep.subr.mxu0 0.0
    %369 = vmatpush1.msra.mxu0 0.0
    %370 = vmatprep.subr.mxu0 0.0
    %371 = vmatpush1.msra.mxu0 0.0
    %372 = vmatprep.subr.mxu0 0.0
    %373 = vmatpush1.msra.mxu0 0.0
    %374 = vmatprep.subr.mxu0 0.0
    %375 = vmatpush1.msra.mxu0 0.0
    %376 = vmatprep.subr.mxu0 0.0
    %377 = vmatpush1.msra.mxu0 0.0
    %378 = vmatprep.subr.mxu0 0.0
    %379 = vmatpush1.msra.mxu0 0.0
    %380 = vmatprep.subr.mxu0 0.0
    %381 = vmatpush1.msra.mxu0 0.0
    %382 = vmatprep.subr.mxu0 0.0
    %383 = vmatpush1.msra.mxu0 0.0
    %384 = vmatprep.subr.mxu0 0.0
    %385 = vmatpush1.msra.mxu0 0.0
    %386 = vmatprep.subr.mxu0 0.0
    %387 = vmatpush1.msra.mxu0 0.0
    %388 = vmatprep.subr.mxu0 0.0
    %389 = vmatpush1.msra.mxu0 0.0
    %390 = vmatprep.subr.mxu0 0.0
    %391 = vmatpush1.msra.mxu0 0.0
    %392 = vmatprep.mubr.f32.mxu0 0.0
    %393 = vmatmul.mubr.f32.gmra.mrb[0].mxu0 %v304
    %v394 = vpop.f32.mrb[0].mxu0
    %v395 = vadd.f32 %v327, %v394
    %v396 = vpop.f32.mrb[0].mxu0
    %397 = vdwg.mxu0
    %v398 = vmax.f32 %v395, 0.0
    %v399 = vld [vmem:[%s1] sm:$0xff]
    %v400 = vld [vmem:[%s1 + $0x8] sm:$0xff]
    %v401 = vld [vmem:[%s1 + $0x10] sm:$0xff]
    %v402 = vld [vmem:[%s1 + $0x18] sm:$0xff]
    %v403 = vld [vmem:[%s1 + $0x20] sm:$0xff]
    %v404 = vld [vmem:[%s1 + $0x28] sm:$0xff]
    %v405 = vld [vmem:[%s1 + $0x30] sm:$0xff]
    %v406 = vld [vmem:[%s1 + $0x38] sm:$0xff]
    %v407 = vld [vmem:[#allocation2 + $0x100] sm:$0xff]
    %v408 = vld [vmem:[#allocation2 + $0x108] sm:$0xff]
    %vm409 = vcmask 130048
    %v411 = vsel %vm409, %v399, 0
    %v414 = vsel %vm409, %v400, 0
    %v417 = vsel %vm409, %v401, 0
    %v420 = vsel %vm409, %v402, 0
    %v423 = vsel %vm409, %v403, 0
    %v426 = vsel %vm409, %v404, 0
    %v429 = vsel %vm409, %v405, 0
    %v432 = vsel %vm409, %v406, 0
    %434 = vmatprep.subr.mxu0 0.0
    %435 = vmatpush1.msra.mxu0 %v407
    %436 = vmatprep.subr.mxu0 0.0
    %437 = vmatpush1.msra.mxu0 %v408
    %438 = vmatprep.subr.mxu0 0.0
    %439 = vmatpush1.msra.mxu0 0.0
    %440 = vmatprep.subr.mxu0 0.0
    %441 = vmatpush1.msra.mxu0 0.0
    %442 = vmatprep.subr.mxu0 0.0
    %443 = vmatpush1.msra.mxu0 0.0
    %444 = vmatprep.subr.mxu0 0.0
    %445 = vmatpush1.msra.mxu0 0.0
    %446 = vmatprep.subr.mxu0 0.0
    %447 = vmatpush1.msra.mxu0 0.0
    %448 = vmatprep.subr.mxu0 0.0
    %449 = vmatpush1.msra.mxu0 0.0
    %450 = vmatprep.subr.mxu0 0.0
    %451 = vmatpush1.msra.mxu0 0.0
    %452 = vmatprep.subr.mxu0 0.0
    %453 = vmatpush1.msra.mxu0 0.0
    %454 = vmatprep.subr.mxu0 0.0
    %455 = vmatpush1.msra.mxu0 0.0
    %456 = vmatprep.subr.mxu0 0.0
    %457 = vmatpush1.msra.mxu0 0.0
    %458 = vmatprep.subr.mxu0 0.0
    %459 = vmatpush1.msra.mxu0 0.0
    %460 = vmatprep.subr.mxu0 0.0
    %461 = vmatpush1.msra.mxu0 0.0
    %462 = vmatprep.subr.mxu0 0.0
    %463 = vmatpush1.msra.mxu0 0.0
    %464 = vmatprep.subr.mxu0 0.0
    %465 = vmatpush1.msra.mxu0 0.0
    %466 = vmatprep.subr.mxu0 0.0
    %467 = vmatpush1.msra.mxu0 0.0
    %468 = vmatprep.subr.mxu0 0.0
    %469 = vmatpush1.msra.mxu0 0.0
    %470 = vmatprep.subr.mxu0 0.0
    %471 = vmatpush1.msra.mxu0 0.0
    %472 = vmatprep.subr.mxu0 0.0
    %473 = vmatpush1.msra.mxu0 0.0
    %474 = vmatprep.subr.mxu0 0.0
    %475 = vmatpush1.msra.mxu0 0.0
    %476 = vmatprep.subr.mxu0 0.0
    %477 = vmatpush1.msra.mxu0 0.0
    %478 = vmatprep.subr.mxu0 0.0
    %479 = vmatpush1.msra.mxu0 0.0
    %480 = vmatprep.subr.mxu0 0.0
    %481 = vmatpush1.msra.mxu0 0.0
    %482 = vmatprep.subr.mxu0 0.0
    %483 = vmatpush1.msra.mxu0 0.0
    %484 = vmatprep.subr.mxu0 0.0
    %485 = vmatpush1.msra.mxu0 0.0
    %486 = vmatprep.subr.mxu0 0.0
    %487 = vmatpush1.msra.mxu0 0.0
    %488 = vmatprep.subr.mxu0 0.0
    %489 = vmatpush1.msra.mxu0 0.0
    %490 = vmatprep.subr.mxu0 0.0
    %491 = vmatpush1.msra.mxu0 0.0
    %492 = vmatprep.subr.mxu0 0.0
    %493 = vmatpush1.msra.mxu0 0.0
    %494 = vmatprep.subr.mxu0 0.0
    %495 = vmatpush1.msra.mxu0 0.0
    %496 = vmatprep.subr.mxu0 0.0
    %497 = vmatpush1.msra.mxu0 0.0
    %498 = vmatprep.mubr.f32.mxu0 0.0
    %499 = vmatmul.mubr.f32.gmra.mrb[0].mxu0 %v411
    %v500 = vpop.f32.mrb[0].mxu0
    %v501 = vadd.f32 0.0, %v500
    %v502 = vpop.f32.mrb[0].mxu0
    %503 = vmatprep.mubr.f32.mxu0 0.0
    %504 = vmatmul.mubr.f32.gmra.mrb[0].mxu0 %v414
    %v505 = vpop.f32.mrb[0].mxu0
    %v506 = vadd.f32 0.0, %v505
    %v507 = vpop.f32.mrb[0].mxu0
    %508 = vmatprep.mubr.f32.mxu0 0.0
    %509 = vmatmul.mubr.f32.gmra.mrb[0].mxu0 %v417
    %v510 = vpop.f32.mrb[0].mxu0
    %v511 = vadd.f32 0.0, %v510
    %v512 = vpop.f32.mrb[0].mxu0
    %513 = vmatprep.mubr.f32.mxu0 0.0
    %514 = vmatmul.mubr.f32.gmra.mrb[0].mxu0 %v420
    %v515 = vpop.f32.mrb[0].mxu0
    %v516 = vadd.f32 0.0, %v515
    %v517 = vpop.f32.mrb[0].mxu0
    %518 = vmatprep.mubr.f32.mxu0 0.0
    %519 = vmatmul.mubr.f32.gmra.mrb[0].mxu0 %v423
    %v520 = vpop.f32.mrb[0].mxu0
    %v521 = vadd.f32 0.0, %v520
    %v522 = vpop.f32.mrb[0].mxu0
    %523 = vmatprep.mubr.f32.mxu0 0.0
    %524 = vmatmul.mubr.f32.gmra.mrb[0].mxu0 %v426
    %v525 = vpop.f32.mrb[0].mxu0
    %v526 = vadd.f32 0.0, %v525
    %v527 = vpop.f32.mrb[0].mxu0
    %528 = vmatprep.mubr.f32.mxu0 0.0
    %529 = vmatmul.mubr.f32.gmra.mrb[0].mxu0 %v429
    %v530 = vpop.f32.mrb[0].mxu0
    %v531 = vadd.f32 0.0, %v530
    %v532 = vpop.f32.mrb[0].mxu0
    %533 = vmatprep.mubr.f32.mxu0 0.0
    %534 = vmatmul.mubr.f32.gmra.mrb[0].mxu0 %v432
    %v535 = vpop.f32.mrb[0].mxu0
    %v536 = vadd.f32 0.0, %v535
    %v537 = vpop.f32.mrb[0].mxu0
    %538 = vdwg.mxu0
    %v539 = vld [vmem:[%s3] sm:$0xff]
    %v540 = vld [vmem:[%s3 + $0x8] sm:$0xff]
    %v541 = vld [vmem:[%s3 + $0x10] sm:$0xff]
    %v542 = vld [vmem:[%s3 + $0x18] sm:$0xff]
    %v543 = vld [vmem:[%s3 + $0x20] sm:$0xff]
    %v544 = vld [vmem:[%s3 + $0x28] sm:$0xff]
    %v545 = vld [vmem:[%s3 + $0x30] sm:$0xff]
    %v546 = vld [vmem:[%s3 + $0x38] sm:$0xff]
    %v547 = vld [vmem:[%s3 + $0x40] sm:$0xff]
    %v548 = vld [vmem:[%s3 + $0x48] sm:$0xff]
    %v549 = vld [vmem:[%s3 + $0x50] sm:$0xff]
    %v550 = vld [vmem:[%s3 + $0x58] sm:$0xff]
    %v551 = vld [vmem:[%s3 + $0x60] sm:$0xff]
    %v552 = vld [vmem:[%s3 + $0x68] sm:$0xff]
    %v553 = vld [vmem:[%s3 + $0x70] sm:$0xff]
    %v554 = vld [vmem:[%s3 + $0x78] sm:$0xff]
    %555 = vset.pattern.permute.xlu0 0
    %556 = vperm.xlu0 %555, %v539
    %v557 = vpop.permute.xlu0 %556
    %558 = vset.pattern.permute.xlu0 0
    %559 = vperm.xlu0 %558, %v540
    %v560 = vpop.permute.xlu0 %559
    %561 = vset.pattern.permute.xlu0 0
    %562 = vperm.xlu0 %561, %v541
    %v563 = vpop.permute.xlu0 %562
    %564 = vset.pattern.permute.xlu0 0
    %565 = vperm.xlu0 %564, %v542
    %v566 = vpop.permute.xlu0 %565
    %567 = vset.pattern.permute.xlu0 0
    %568 = vperm.xlu0 %567, %v543
    %v569 = vpop.permute.xlu0 %568
    %570 = vset.pattern.permute.xlu0 0
    %571 = vperm.xlu0 %570, %v544
    %v572 = vpop.permute.xlu0 %571
    %573 = vset.pattern.permute.xlu0 0
    %574 = vperm.xlu0 %573, %v545
    %v575 = vpop.permute.xlu0 %574
    %576 = vset.pattern.permute.xlu0 0
    %577 = vperm.xlu0 %576, %v546
    %v578 = vpop.permute.xlu0 %577
    %579 = vset.pattern.permute.xlu0 0
    %580 = vperm.xlu0 %579, %v547
    %v581 = vpop.permute.xlu0 %580
    %582 = vset.pattern.permute.xlu0 0
    %583 = vperm.xlu0 %582, %v548
    %v584 = vpop.permute.xlu0 %583
    %585 = vset.pattern.permute.xlu0 0
    %586 = vperm.xlu0 %585, %v549
    %v587 = vpop.permute.xlu0 %586
    %588 = vset.pattern.permute.xlu0 0
    %589 = vperm.xlu0 %588, %v550
    %v590 = vpop.permute.xlu0 %589
    %591 = vset.pattern.permute.xlu0 0
    %592 = vperm.xlu0 %591, %v551
    %v593 = vpop.permute.xlu0 %592
    %594 = vset.pattern.permute.xlu0 0
    %595 = vperm.xlu0 %594, %v552
    %v596 = vpop.permute.xlu0 %595
    %597 = vset.pattern.permute.xlu0 0
    %598 = vperm.xlu0 %597, %v553
    %v599 = vpop.permute.xlu0 %598
    %600 = vset.pattern.permute.xlu0 0
    %601 = vperm.xlu0 %600, %v554
    %v602 = vpop.permute.xlu0 %601
    %vm603 = vcmp.eq.s32.totalorder %v44, %v557
    %vm604 = vcmp.eq.s32.totalorder %v44, %v560
    %vm605 = vcmp.eq.s32.totalorder %v44, %v563
    %vm606 = vcmp.eq.s32.totalorder %v44, %v566
    %vm607 = vcmp.eq.s32.totalorder %v44, %v569
    %vm608 = vcmp.eq.s32.totalorder %v44, %v572
    %vm609 = vcmp.eq.s32.totalorder %v44, %v575
    %vm610 = vcmp.eq.s32.totalorder %v44, %v578
    %vm611 = vcmp.eq.s32.totalorder %v44, %v581
    %vm612 = vcmp.eq.s32.totalorder %v44, %v584
    %vm613 = vcmp.eq.s32.totalorder %v44, %v587
    %vm614 = vcmp.eq.s32.totalorder %v44, %v590
    %vm615 = vcmp.eq.s32.totalorder %v44, %v593
    %vm616 = vcmp.eq.s32.totalorder %v44, %v596
    %vm617 = vcmp.eq.s32.totalorder %v44, %v599
    %vm618 = vcmp.eq.s32.totalorder %v44, %v602
    %v619 = vsel %vm603, 1.0, 0.0
    %v620 = vsel %vm604, 1.0, 0.0
    %v621 = vsel %vm605, 1.0, 0.0
    %v622 = vsel %vm606, 1.0, 0.0
    %v623 = vsel %vm607, 1.0, 0.0
    %v624 = vsel %vm608, 1.0, 0.0
    %v625 = vsel %vm609, 1.0, 0.0
    %v626 = vsel %vm610, 1.0, 0.0
    %v627 = vsel %vm611, 1.0, 0.0
    %v628 = vsel %vm612, 1.0, 0.0
    %v629 = vsel %vm613, 1.0, 0.0
    %v630 = vsel %vm614, 1.0, 0.0
    %v631 = vsel %vm615, 1.0, 0.0
    %v632 = vsel %vm616, 1.0, 0.0
    %v633 = vsel %vm617, 1.0, 0.0
    %v634 = vsel %vm618, 1.0, 0.0
    %v635 = vld [vmem:[%s2] sm:$0xff]
    %v636 = vld [vmem:[%s2 + $0x8] sm:$0xff]
    %v637 = vld [vmem:[%s2 + $0x10] sm:$0xff]
    %v638 = vld [vmem:[%s2 + $0x18] sm:$0xff]
    %v639 = vld [vmem:[%s2 + $0x20] sm:$0xff]
    %v640 = vld [vmem:[%s2 + $0x28] sm:$0xff]
    %v641 = vld [vmem:[%s2 + $0x30] sm:$0xff]
    %v642 = vld [vmem:[%s2 + $0x38] sm:$0xff]
    %v643 = vld [vmem:[%s2 + $0x40] sm:$0xff]
    %v644 = vld [vmem:[%s2 + $0x48] sm:$0xff]
    %v645 = vld [vmem:[%s2 + $0x50] sm:$0xff]
    %v646 = vld [vmem:[%s2 + $0x58] sm:$0xff]
    %v647 = vld [vmem:[%s2 + $0x60] sm:$0xff]
    %v648 = vld [vmem:[%s2 + $0x68] sm:$0xff]
    %v649 = vld [vmem:[%s2 + $0x70] sm:$0xff]
    %v650 = vld [vmem:[%s2 + $0x78] sm:$0xff]
    %v651 = vld [vmem:[#allocation2 + $0x110] sm:$0xff]
    %vm652 = vcmask 64512
    %v654 = vsel %vm652, %v635, 0
    %v657 = vsel %vm652, %v636, 0
    %v660 = vsel %vm652, %v637, 0
    %v663 = vsel %vm652, %v638, 0
    %v666 = vsel %vm652, %v639, 0
    %v669 = vsel %vm652, %v640, 0
    %v672 = vsel %vm652, %v641, 0
    %v675 = vsel %vm652, %v642, 0
    %v678 = vsel %vm652, %v643, 0
    %v681 = vsel %vm652, %v644, 0
    %v684 = vsel %vm652, %v645, 0
    %v687 = vsel %vm652, %v646, 0
    %v690 = vsel %vm652, %v647, 0
    %v693 = vsel %vm652, %v648, 0
    %v696 = vsel %vm652, %v649, 0
    %v699 = vsel %vm652, %v650, 0
    %701 = vmatprep.subr.mxu0 0.0
    %702 = vmatpush1.msra.mxu0 %v651
    %703 = vmatprep.subr.mxu0 0.0
    %704 = vmatpush1.msra.mxu0 0.0
    %705 = vmatprep.subr.mxu0 0.0
    %706 = vmatpush1.msra.mxu0 0.0
    %707 = vmatprep.subr.mxu0 0.0
    %708 = vmatpush1.msra.mxu0 0.0
    %709 = vmatprep.subr.mxu0 0.0
    %710 = vmatpush1.msra.mxu0 0.0
    %711 = vmatprep.subr.mxu0 0.0
    %712 = vmatpush1.msra.mxu0 0.0
    %713 = vmatprep.subr.mxu0 0.0
    %714 = vmatpush1.msra.mxu0 0.0
    %715 = vmatprep.subr.mxu0 0.0
    %716 = vmatpush1.msra.mxu0 0.0
    %717 = vmatprep.subr.mxu0 0.0
    %718 = vmatpush1.msra.mxu0 0.0
    %719 = vmatprep.subr.mxu0 0.0
    %720 = vmatpush1.msra.mxu0 0.0
    %721 = vmatprep.subr.mxu0 0.0
    %722 = vmatpush1.msra.mxu0 0.0
    %723 = vmatprep.subr.mxu0 0.0
    %724 = vmatpush1.msra.mxu0 0.0
    %725 = vmatprep.subr.mxu0 0.0
    %726 = vmatpush1.msra.mxu0 0.0
    %727 = vmatprep.subr.mxu0 0.0
    %728 = vmatpush1.msra.mxu0 0.0
    %729 = vmatprep.subr.mxu0 0.0
    %730 = vmatpush1.msra.mxu0 0.0
    %731 = vmatprep.subr.mxu0 0.0
    %732 = vmatpush1.msra.mxu0 0.0
    %733 = vmatprep.subr.mxu0 0.0
    %734 = vmatpush1.msra.mxu0 0.0
    %735 = vmatprep.subr.mxu0 0.0
    %736 = vmatpush1.msra.mxu0 0.0
    %737 = vmatprep.subr.mxu0 0.0
    %738 = vmatpush1.msra.mxu0 0.0
    %739 = vmatprep.subr.mxu0 0.0
    %740 = vmatpush1.msra.mxu0 0.0
    %741 = vmatprep.subr.mxu0 0.0
    %742 = vmatpush1.msra.mxu0 0.0
    %743 = vmatprep.subr.mxu0 0.0
    %744 = vmatpush1.msra.mxu0 0.0
    %745 = vmatprep.subr.mxu0 0.0
    %746 = vmatpush1.msra.mxu0 0.0
    %747 = vmatprep.subr.mxu0 0.0
    %748 = vmatpush1.msra.mxu0 0.0
    %749 = vmatprep.subr.mxu0 0.0
    %750 = vmatpush1.msra.mxu0 0.0
    %751 = vmatprep.subr.mxu0 0.0
    %752 = vmatpush1.msra.mxu0 0.0
    %753 = vmatprep.subr.mxu0 0.0
    %754 = vmatpush1.msra.mxu0 0.0
    %755 = vmatprep.subr.mxu0 0.0
    %756 = vmatpush1.msra.mxu0 0.0
    %757 = vmatprep.subr.mxu0 0.0
    %758 = vmatpush1.msra.mxu0 0.0
    %759 = vmatprep.subr.mxu0 0.0
    %760 = vmatpush1.msra.mxu0 0.0
    %761 = vmatprep.subr.mxu0 0.0
    %762 = vmatpush1.msra.mxu0 0.0
    %763 = vmatprep.subr.mxu0 0.0
    %764 = vmatpush1.msra.mxu0 0.0
    %765 = vmatprep.mubr.f32.mxu0 0.0
    %766 = vmatmul.mubr.f32.gmra.mrb[0].mxu0 %v654
    %v767 = vpop.f32.mrb[0].mxu0
    %v768 = vadd.f32 0.0, %v767
    %v769 = vpop.f32.mrb[0].mxu0
    %770 = vmatprep.mubr.f32.mxu0 0.0
    %771 = vmatmul.mubr.f32.gmra.mrb[0].mxu0 %v657
    %v772 = vpop.f32.mrb[0].mxu0
    %v773 = vadd.f32 0.0, %v772
    %v774 = vpop.f32.mrb[0].mxu0
    %775 = vmatprep.mubr.f32.mxu0 0.0
    %776 = vmatmul.mubr.f32.gmra.mrb[0].mxu0 %v660
    %v777 = vpop.f32.mrb[0].mxu0
    %v778 = vadd.f32 0.0, %v777
    %v779 = vpop.f32.mrb[0].mxu0
    %780 = vmatprep.mubr.f32.mxu0 0.0
    %781 = vmatmul.mubr.f32.gmra.mrb[0].mxu0 %v663
    %v782 = vpop.f32.mrb[0].mxu0
    %v783 = vadd.f32 0.0, %v782
    %v784 = vpop.f32.mrb[0].mxu0
    %785 = vmatprep.mubr.f32.mxu0 0.0
    %786 = vmatmul.mubr.f32.gmra.mrb[0].mxu0 %v666
    %v787 = vpop.f32.mrb[0].mxu0
    %v788 = vadd.f32 0.0, %v787
    %v789 = vpop.f32.mrb[0].mxu0
    %790 = vmatprep.mubr.f32.mxu0 0.0
    %791 = vmatmul.mubr.f32.gmra.mrb[0].mxu0 %v669
    %v792 = vpop.f32.mrb[0].mxu0
    %v793 = vadd.f32 0.0, %v792
    %v794 = vpop.f32.mrb[0].mxu0
    %795 = vmatprep.mubr.f32.mxu0 0.0
    %796 = vmatmul.mubr.f32.gmra.mrb[0].mxu0 %v672
    %v797 = vpop.f32.mrb[0].mxu0
    %v798 = vadd.f32 0.0, %v797
    %v799 = vpop.f32.mrb[0].mxu0
    %800 = vmatprep.mubr.f32.mxu0 0.0
    %801 = vmatmul.mubr.f32.gmra.mrb[0].mxu0 %v675
    %v802 = vpop.f32.mrb[0].mxu0
    %v803 = vadd.f32 0.0, %v802
    %v804 = vpop.f32.mrb[0].mxu0
    %805 = vmatprep.mubr.f32.mxu0 0.0
    %806 = vmatmul.mubr.f32.gmra.mrb[0].mxu0 %v678
    %v807 = vpop.f32.mrb[0].mxu0
    %v808 = vadd.f32 0.0, %v807
    %v809 = vpop.f32.mrb[0].mxu0
    %810 = vmatprep.mubr.f32.mxu0 0.0
    %811 = vmatmul.mubr.f32.gmra.mrb[0].mxu0 %v681
    %v812 = vpop.f32.mrb[0].mxu0
    %v813 = vadd.f32 0.0, %v812
    %v814 = vpop.f32.mrb[0].mxu0
    %815 = vmatprep.mubr.f32.mxu0 0.0
    %816 = vmatmul.mubr.f32.gmra.mrb[0].mxu0 %v684
    %v817 = vpop.f32.mrb[0].mxu0
    %v818 = vadd.f32 0.0, %v817
    %v819 = vpop.f32.mrb[0].mxu0
    %820 = vmatprep.mubr.f32.mxu0 0.0
    %821 = vmatmul.mubr.f32.gmra.mrb[0].mxu0 %v687
    %v822 = vpop.f32.mrb[0].mxu0
    %v823 = vadd.f32 0.0, %v822
    %v824 = vpop.f32.mrb[0].mxu0
    %825 = vmatprep.mubr.f32.mxu0 0.0
    %826 = vmatmul.mubr.f32.gmra.mrb[0].mxu0 %v690
    %v827 = vpop.f32.mrb[0].mxu0
    %v828 = vadd.f32 0.0, %v827
    %v829 = vpop.f32.mrb[0].mxu0
    %830 = vmatprep.mubr.f32.mxu0 0.0
    %831 = vmatmul.mubr.f32.gmra.mrb[0].mxu0 %v693
    %v832 = vpop.f32.mrb[0].mxu0
    %v833 = vadd.f32 0.0, %v832
    %v834 = vpop.f32.mrb[0].mxu0
    %835 = vmatprep.mubr.f32.mxu0 0.0
    %836 = vmatmul.mubr.f32.gmra.mrb[0].mxu0 %v696
    %v837 = vpop.f32.mrb[0].mxu0
    %v838 = vadd.f32 0.0, %v837
    %v839 = vpop.f32.mrb[0].mxu0
    %840 = vmatprep.mubr.f32.mxu0 0.0
    %841 = vmatmul.mubr.f32.gmra.mrb[0].mxu0 %v699
    %v842 = vpop.f32.mrb[0].mxu0
    %v843 = vadd.f32 0.0, %v842
    %v844 = vpop.f32.mrb[0].mxu0
    %845 = vdwg.mxu0
    %vm846 = vcmask 523264
    %v848 = vsel %vm846, %v619, 0
    %v851 = vsel %vm846, %v620, 0
    %v854 = vsel %vm846, %v621, 0
    %v857 = vsel %vm846, %v622, 0
    %v860 = vsel %vm846, %v623, 0
    %v863 = vsel %vm846, %v624, 0
    %v866 = vsel %vm846, %v625, 0
    %v869 = vsel %vm846, %v626, 0
    %v872 = vsel %vm846, %v627, 0
    %v875 = vsel %vm846, %v628, 0
    %v878 = vsel %vm846, %v629, 0
    %v881 = vsel %vm846, %v630, 0
    %v884 = vsel %vm846, %v631, 0
    %v887 = vsel %vm846, %v632, 0
    %v890 = vsel %vm846, %v633, 0
    %v893 = vsel %vm846, %v634, 0
    %895 = vmatprep.subr.mxu0 0.0
    %896 = vmatpush1.msra.mxu0 %v501
    %897 = vmatprep.subr.mxu0 0.0
    %898 = vmatpush1.msra.mxu0 %v506
    %899 = vmatprep.subr.mxu0 0.0
    %900 = vmatpush1.msra.mxu0 %v511
    %901 = vmatprep.subr.mxu0 0.0
    %902 = vmatpush1.msra.mxu0 %v516
    %903 = vmatprep.subr.mxu0 0.0
    %904 = vmatpush1.msra.mxu0 %v521
    %905 = vmatprep.subr.mxu0 0.0
    %906 = vmatpush1.msra.mxu0 %v526
    %907 = vmatprep.subr.mxu0 0.0
    %908 = vmatpush1.msra.mxu0 %v531
    %909 = vmatprep.subr.mxu0 0.0
    %910 = vmatpush1.msra.mxu0 %v536
    %911 = vmatprep.subr.mxu0 0.0
    %912 = vmatpush1.msra.mxu0 0.0
    %913 = vmatprep.subr.mxu0 0.0
    %914 = vmatpush1.msra.mxu0 0.0
    %915 = vmatprep.subr.mxu0 0.0
    %916 = vmatpush1.msra.mxu0 0.0
    %917 = vmatprep.subr.mxu0 0.0
    %918 = vmatpush1.msra.mxu0 0.0
    %919 = vmatprep.subr.mxu0 0.0
    %920 = vmatpush1.msra.mxu0 0.0
    %921 = vmatprep.subr.mxu0 0.0
    %922 = vmatpush1.msra.mxu0 0.0
    %923 = vmatprep.subr.mxu0 0.0
    %924 = vmatpush1.msra.mxu0 0.0
    %925 = vmatprep.subr.mxu0 0.0
    %926 = vmatpush1.msra.mxu0 0.0
    %927 = vmatprep.subr.mxu0 0.0
    %928 = vmatpush1.msra.mxu0 0.0
    %929 = vmatprep.subr.mxu0 0.0
    %930 = vmatpush1.msra.mxu0 0.0
    %931 = vmatprep.subr.mxu0 0.0
    %932 = vmatpush1.msra.mxu0 0.0
    %933 = vmatprep.subr.mxu0 0.0
    %934 = vmatpush1.msra.mxu0 0.0
    %935 = vmatprep.subr.mxu0 0.0
    %936 = vmatpush1.msra.mxu0 0.0
    %937 = vmatprep.subr.mxu0 0.0
    %938 = vmatpush1.msra.mxu0 0.0
    %939 = vmatprep.subr.mxu0 0.0
    %940 = vmatpush1.msra.mxu0 0.0
    %941 = vmatprep.subr.mxu0 0.0
    %942 = vmatpush1.msra.mxu0 0.0
    %943 = vmatprep.subr.mxu0 0.0
    %944 = vmatpush1.msra.mxu0 0.0
    %945 = vmatprep.subr.mxu0 0.0
    %946 = vmatpush1.msra.mxu0 0.0
    %947 = vmatprep.subr.mxu0 0.0
    %948 = vmatpush1.msra.mxu0 0.0
    %949 = vmatprep.subr.mxu0 0.0
    %950 = vmatpush1.msra.mxu0 0.0
    %951 = vmatprep.subr.mxu0 0.0
    %952 = vmatpush1.msra.mxu0 0.0
    %953 = vmatprep.subr.mxu0 0.0
    %954 = vmatpush1.msra.mxu0 0.0
    %955 = vmatprep.subr.mxu0 0.0
    %956 = vmatpush1.msra.mxu0 0.0
    %957 = vmatprep.subr.mxu0 0.0
    %958 = vmatpush1.msra.mxu0 0.0
    %959 = vmatprep.mubr.f32.mxu0 0.0
    %960 = vmatmul.mubr.f32.gmra.mrb[0].mxu0 %v848
    %v961 = vpop.f32.mrb[0].mxu0
    %v962 = vadd.f32 %v768, %v961
    %v963 = vpop.f32.mrb[0].mxu0
    %964 = vmatprep.mubr.f32.mxu0 0.0
    %965 = vmatmul.mubr.f32.gmra.mrb[0].mxu0 %v851
    %v966 = vpop.f32.mrb[0].mxu0
    %v967 = vadd.f32 %v773, %v966
    %v968 = vpop.f32.mrb[0].mxu0
    %969 = vmatprep.mubr.f32.mxu0 0.0
    %970 = vmatmul.mubr.f32.gmra.mrb[0].mxu0 %v854
    %v971 = vpop.f32.mrb[0].mxu0
    %v972 = vadd.f32 %v778, %v971
    %v973 = vpop.f32.mrb[0].mxu0
    %974 = vmatprep.mubr.f32.mxu0 0.0
    %975 = vmatmul.mubr.f32.gmra.mrb[0].mxu0 %v857
    %v976 = vpop.f32.mrb[0].mxu0
    %v977 = vadd.f32 %v783, %v976
    %v978 = vpop.f32.mrb[0].mxu0
    %979 = vmatprep.mubr.f32.mxu0 0.0
    %980 = vmatmul.mubr.f32.gmra.mrb[0].mxu0 %v860
    %v981 = vpop.f32.mrb[0].mxu0
    %v982 = vadd.f32 %v788, %v981
    %v983 = vpop.f32.mrb[0].mxu0
    %984 = vmatprep.mubr.f32.mxu0 0.0
    %985 = vmatmul.mubr.f32.gmra.mrb[0].mxu0 %v863
    %v986 = vpop.f32.mrb[0].mxu0
    %v987 = vadd.f32 %v793, %v986
    %v988 = vpop.f32.mrb[0].mxu0
    %989 = vmatprep.mubr.f32.mxu0 0.0
    %990 = vmatmul.mubr.f32.gmra.mrb[0].mxu0 %v866
    %v991 = vpop.f32.mrb[0].mxu0
    %v992 = vadd.f32 %v798, %v991
    %v993 = vpop.f32.mrb[0].mxu0
    %994 = vmatprep.mubr.f32.mxu0 0.0
    %995 = vmatmul.mubr.f32.gmra.mrb[0].mxu0 %v869
    %v996 = vpop.f32.mrb[0].mxu0
    %v997 = vadd.f32 %v803, %v996
    %v998 = vpop.f32.mrb[0].mxu0
    %999 = vmatprep.mubr.f32.mxu0 0.0
    %1000 = vmatmul.mubr.f32.gmra.mrb[0].mxu0 %v872
    %v1001 = vpop.f32.mrb[0].mxu0
    %v1002 = vadd.f32 %v808, %v1001
    %v1003 = vpop.f32.mrb[0].mxu0
    %1004 = vmatprep.mubr.f32.mxu0 0.0
    %1005 = vmatmul.mubr.f32.gmra.mrb[0].mxu0 %v875
    %v1006 = vpop.f32.mrb[0].mxu0
    %v1007 = vadd.f32 %v813, %v1006
    %v1008 = vpop.f32.mrb[0].mxu0
    %1009 = vmatprep.mubr.f32.mxu0 0.0
    %1010 = vmatmul.mubr.f32.gmra.mrb[0].mxu0 %v878
    %v1011 = vpop.f32.mrb[0].mxu0
    %v1012 = vadd.f32 %v818, %v1011
    %v1013 = vpop.f32.mrb[0].mxu0
    %1014 = vmatprep.mubr.f32.mxu0 0.0
    %1015 = vmatmul.mubr.f32.gmra.mrb[0].mxu0 %v881
    %v1016 = vpop.f32.mrb[0].mxu0
    %v1017 = vadd.f32 %v823, %v1016
    %v1018 = vpop.f32.mrb[0].mxu0
    %1019 = vmatprep.mubr.f32.mxu0 0.0
    %1020 = vmatmul.mubr.f32.gmra.mrb[0].mxu0 %v884
    %v1021 = vpop.f32.mrb[0].mxu0
    %v1022 = vadd.f32 %v828, %v1021
    %v1023 = vpop.f32.mrb[0].mxu0
    %1024 = vmatprep.mubr.f32.mxu0 0.0
    %1025 = vmatmul.mubr.f32.gmra.mrb[0].mxu0 %v887
    %v1026 = vpop.f32.mrb[0].mxu0
    %v1027 = vadd.f32 %v833, %v1026
    %v1028 = vpop.f32.mrb[0].mxu0
    %1029 = vmatprep.mubr.f32.mxu0 0.0
    %1030 = vmatmul.mubr.f32.gmra.mrb[0].mxu0 %v890
    %v1031 = vpop.f32.mrb[0].mxu0
    %v1032 = vadd.f32 %v838, %v1031
    %v1033 = vpop.f32.mrb[0].mxu0
    %1034 = vmatprep.mubr.f32.mxu0 0.0
    %1035 = vmatmul.mubr.f32.gmra.mrb[0].mxu0 %v893
    %v1036 = vpop.f32.mrb[0].mxu0
    %v1037 = vadd.f32 %v843, %v1036
    %v1038 = vpop.f32.mrb[0].mxu0
    %1039 = vdwg.mxu0
    %v1040 = vld [vmem:[%s7 + $0x1] sm:$0x1]
    %v1041 = vlaneseq
    %v1042 = vshrl.u32 %v1041, 7
    %v1043 = vsub.s32 0, %v1042
    %v1044 = vrot.slane %v1040, %v1043
    %v1045 = vadd.f32 %v962, %v1044
    %v1046 = vadd.f32 %v967, %v1044
    %v1047 = vadd.f32 %v972, %v1044
    %v1048 = vadd.f32 %v977, %v1044
    %v1049 = vadd.f32 %v982, %v1044
    %v1050 = vadd.f32 %v987, %v1044
    %v1051 = vadd.f32 %v992, %v1044
    %v1052 = vadd.f32 %v997, %v1044
    %v1053 = vadd.f32 %v1002, %v1044
    %v1054 = vadd.f32 %v1007, %v1044
    %v1055 = vadd.f32 %v1012, %v1044
    %v1056 = vadd.f32 %v1017, %v1044
    %v1057 = vadd.f32 %v1022, %v1044
    %v1058 = vadd.f32 %v1027, %v1044
    %v1059 = vadd.f32 %v1032, %v1044
    %v1060 = vadd.f32 %v1037, %v1044
    %v1061 = vmax.f32 %v1045, 0.0
    %v1062 = vmax.f32 %v1046, 0.0
    %v1063 = vmax.f32 %v1047, 0.0
    %v1064 = vmax.f32 %v1048, 0.0
    %v1065 = vmax.f32 %v1049, 0.0
    %v1066 = vmax.f32 %v1050, 0.0
    %v1067 = vmax.f32 %v1051, 0.0
    %v1068 = vmax.f32 %v1052, 0.0
    %v1069 = vmax.f32 %v1053, 0.0
    %v1070 = vmax.f32 %v1054, 0.0
    %v1071 = vmax.f32 %v1055, 0.0
    %v1072 = vmax.f32 %v1056, 0.0
    %v1073 = vmax.f32 %v1057, 0.0
    %v1074 = vmax.f32 %v1058, 0.0
    %v1075 = vmax.f32 %v1059, 0.0
    %v1076 = vmax.f32 %v1060, 0.0
    %v1077 = vadd.s32 %v142, 8
    %v1078 = vadd.s32 %v142, 16
    %v1079 = vadd.s32 %v142, 24
    %v1080 = vadd.s32 %v142, 32
    %v1081 = vadd.s32 %v142, 40
    %v1082 = vadd.s32 %v142, 48
    %v1083 = vadd.s32 %v142, 56
    %v1084 = vld [vmem:[%s4] sm:$0x1]
    %v1085 = vlaneseq
    %v1086 = vshrl.u32 %v1085, 7
    %v1087 = vsub.s32 0, %v1086
    %v1088 = vrot.slane %v1084, %v1087
    %vm1089 = vcmp.eq.s32.totalorder %v142, %v1088
    %vm1090 = vcmp.eq.s32.totalorder %v1077, %v1088
    %vm1091 = vcmp.eq.s32.totalorder %v1078, %v1088
    %vm1092 = vcmp.eq.s32.totalorder %v1079, %v1088
    %vm1093 = vcmp.eq.s32.totalorder %v1080, %v1088
    %vm1094 = vcmp.eq.s32.totalorder %v1081, %v1088
    %vm1095 = vcmp.eq.s32.totalorder %v1082, %v1088
    %vm1096 = vcmp.eq.s32.totalorder %v1083, %v1088
    %v1097 = vsel %vm1089, 1.0, 0.0
    %v1098 = vsel %vm1090, 1.0, 0.0
    %v1099 = vsel %vm1091, 1.0, 0.0
    %v1100 = vsel %vm1092, 1.0, 0.0
    %v1101 = vsel %vm1093, 1.0, 0.0
    %v1102 = vsel %vm1094, 1.0, 0.0
    %v1103 = vsel %vm1095, 1.0, 0.0
    %v1104 = vsel %vm1096, 1.0, 0.0
    %1105 = vmatprep.subr.mxu0 0.0
    %1106 = vmatpush1.msra.mxu0 %v1061
    %1107 = vmatprep.subr.mxu0 0.0
    %1108 = vmatpush1.msra.mxu0 %v1062
    %1109 = vmatprep.subr.mxu0 0.0
    %1110 = vmatpush1.msra.mxu0 %v1063
    %1111 = vmatprep.subr.mxu0 0.0
    %1112 = vmatpush1.msra.mxu0 %v1064
    %1113 = vmatprep.subr.mxu0 0.0
    %1114 = vmatpush1.msra.mxu0 %v1065
    %1115 = vmatprep.subr.mxu0 0.0
    %1116 = vmatpush1.msra.mxu0 %v1066
    %1117 = vmatprep.subr.mxu0 0.0
    %1118 = vmatpush1.msra.mxu0 %v1067
    %1119 = vmatprep.subr.mxu0 0.0
    %1120 = vmatpush1.msra.mxu0 %v1068
    %1121 = vmatprep.subr.mxu0 0.0
    %1122 = vmatpush1.msra.mxu0 %v1069
    %1123 = vmatprep.subr.mxu0 0.0
    %1124 = vmatpush1.msra.mxu0 %v1070
    %1125 = vmatprep.subr.mxu0 0.0
    %1126 = vmatpush1.msra.mxu0 %v1071
    %1127 = vmatprep.subr.mxu0 0.0
    %1128 = vmatpush1.msra.mxu0 %v1072
    %1129 = vmatprep.subr.mxu0 0.0
    %1130 = vmatpush1.msra.mxu0 %v1073
    %1131 = vmatprep.subr.mxu0 0.0
    %1132 = vmatpush1.msra.mxu0 %v1074
    %1133 = vmatprep.subr.mxu0 0.0
    %1134 = vmatpush1.msra.mxu0 %v1075
    %1135 = vmatprep.subr.mxu0 0.0
    %1136 = vmatpush1.msra.mxu0 %v1076
    %1137 = vmatprep.subr.mxu0 0.0
    %1138 = vmatpush1.msra.mxu0 0.0
    %1139 = vmatprep.subr.mxu0 0.0
    %1140 = vmatpush1.msra.mxu0 0.0
    %1141 = vmatprep.subr.mxu0 0.0
    %1142 = vmatpush1.msra.mxu0 0.0
    %1143 = vmatprep.subr.mxu0 0.0
    %1144 = vmatpush1.msra.mxu0 0.0
    %1145 = vmatprep.subr.mxu0 0.0
    %1146 = vmatpush1.msra.mxu0 0.0
    %1147 = vmatprep.subr.mxu0 0.0
    %1148 = vmatpush1.msra.mxu0 0.0
    %1149 = vmatprep.subr.mxu0 0.0
    %1150 = vmatpush1.msra.mxu0 0.0
    %1151 = vmatprep.subr.mxu0 0.0
    %1152 = vmatpush1.msra.mxu0 0.0
    %1153 = vmatprep.subr.mxu0 0.0
    %1154 = vmatpush1.msra.mxu0 0.0
    %1155 = vmatprep.subr.mxu0 0.0
    %1156 = vmatpush1.msra.mxu0 0.0
    %1157 = vmatprep.subr.mxu0 0.0
    %1158 = vmatpush1.msra.mxu0 0.0
    %1159 = vmatprep.subr.mxu0 0.0
    %1160 = vmatpush1.msra.mxu0 0.0
    %1161 = vmatprep.subr.mxu0 0.0
    %1162 = vmatpush1.msra.mxu0 0.0
    %1163 = vmatprep.subr.mxu0 0.0
    %1164 = vmatpush1.msra.mxu0 0.0
    %1165 = vmatprep.subr.mxu0 0.0
    %1166 = vmatpush1.msra.mxu0 0.0
    %1167 = vmatprep.subr.mxu0 0.0
    %1168 = vmatpush1.msra.mxu0 0.0
    %1169 = vmatprep.mubr.f32.mxu0 0.0
    %1170 = vmatmul.mubr.f32.gmra.mrb[0].mxu0 %v1097
    %v1171 = vpop.f32.mrb[0].mxu0
    %v1172 = vadd.f32 0.0, %v1171
    %v1173 = vpop.f32.mrb[0].mxu0
    %1174 = vmatprep.mubr.f32.mxu0 0.0
    %1175 = vmatmul.mubr.f32.gmra.mrb[0].mxu0 %v1098
    %v1176 = vpop.f32.mrb[0].mxu0
    %v1177 = vadd.f32 0.0, %v1176
    %v1178 = vpop.f32.mrb[0].mxu0
    %1179 = vmatprep.mubr.f32.mxu0 0.0
    %1180 = vmatmul.mubr.f32.gmra.mrb[0].mxu0 %v1099
    %v1181 = vpop.f32.mrb[0].mxu0
    %v1182 = vadd.f32 0.0, %v1181
    %v1183 = vpop.f32.mrb[0].mxu0
    %1184 = vmatprep.mubr.f32.mxu0 0.0
    %1185 = vmatmul.mubr.f32.gmra.mrb[0].mxu0 %v1100
    %v1186 = vpop.f32.mrb[0].mxu0
    %v1187 = vadd.f32 0.0, %v1186
    %v1188 = vpop.f32.mrb[0].mxu0
    %1189 = vmatprep.mubr.f32.mxu0 0.0
    %1190 = vmatmul.mubr.f32.gmra.mrb[0].mxu0 %v1101
    %v1191 = vpop.f32.mrb[0].mxu0
    %v1192 = vadd.f32 0.0, %v1191
    %v1193 = vpop.f32.mrb[0].mxu0
    %1194 = vmatprep.mubr.f32.mxu0 0.0
    %1195 = vmatmul.mubr.f32.gmra.mrb[0].mxu0 %v1102
    %v1196 = vpop.f32.mrb[0].mxu0
    %v1197 = vadd.f32 0.0, %v1196
    %v1198 = vpop.f32.mrb[0].mxu0
    %1199 = vmatprep.mubr.f32.mxu0 0.0
    %1200 = vmatmul.mubr.f32.gmra.mrb[0].mxu0 %v1103
    %v1201 = vpop.f32.mrb[0].mxu0
    %v1202 = vadd.f32 0.0, %v1201
    %v1203 = vpop.f32.mrb[0].mxu0
    %1204 = vmatprep.mubr.f32.mxu0 0.0
    %1205 = vmatmul.mubr.f32.gmra.mrb[0].mxu0 %v1104
    %v1206 = vpop.f32.mrb[0].mxu0
    %v1207 = vadd.f32 0.0, %v1206
    %v1208 = vpop.f32.mrb[0].mxu0
    %1209 = vdwg.mxu0
    %v1210 = vld [vmem:[#allocation2 + $0x120] sm:$0xff]
    %v1211 = vld [vmem:[#allocation2 + $0x128] sm:$0xff]
    %v1212 = vld [vmem:[#allocation2 + $0x130] sm:$0xff]
    %v1213 = vld [vmem:[#allocation2 + $0x138] sm:$0xff]
    %v1214 = vld [vmem:[#allocation2 + $0x140] sm:$0xff]
    %v1215 = vld [vmem:[#allocation2 + $0x148] sm:$0xff]
    %v1216 = vld [vmem:[#allocation2 + $0x150] sm:$0xff]
    %v1217 = vld [vmem:[#allocation2 + $0x158] sm:$0xff]
    %v1218 = vld [vmem:[#allocation2 + $0x160] sm:$0xff]
    %v1219 = vld [vmem:[#allocation2 + $0x168] sm:$0xff]
    %v1220 = vld [vmem:[#allocation2 + $0x170] sm:$0xff]
    %v1221 = vld [vmem:[#allocation2 + $0x178] sm:$0xff]
    %v1222 = vld [vmem:[#allocation2 + $0x180] sm:$0xff]
    %v1223 = vld [vmem:[#allocation2 + $0x188] sm:$0xff]
    %v1224 = vld [vmem:[#allocation2 + $0x190] sm:$0xff]
    %v1225 = vld [vmem:[#allocation2 + $0x198] sm:$0xff]
    %v1226 = vld [vmem:[%s7 + $0x2] sm:$0x1]
    %v1227 = vlaneseq
    %v1228 = vshrl.u32 %v1227, 7
    %v1229 = vsub.s32 0, %v1228
    %v1230 = vrot.slane %v1226, %v1229
    %1231 = vmatprep.subr.mxu0 0.0
    %1232 = vmatpush1.msra.mxu0 %v1210
    %1233 = vmatprep.subr.mxu0 0.0
    %1234 = vmatpush1.msra.mxu0 %v1211
    %1235 = vmatprep.subr.mxu0 0.0
    %1236 = vmatpush1.msra.mxu0 %v1212
    %1237 = vmatprep.subr.mxu0 0.0
    %1238 = vmatpush1.msra.mxu0 %v1213
    %1239 = vmatprep.subr.mxu0 0.0
    %1240 = vmatpush1.msra.mxu0 %v1214
    %1241 = vmatprep.subr.mxu0 0.0
    %1242 = vmatpush1.msra.mxu0 %v1215
    %1243 = vmatprep.subr.mxu0 0.0
    %1244 = vmatpush1.msra.mxu0 %v1216
    %1245 = vmatprep.subr.mxu0 0.0
    %1246 = vmatpush1.msra.mxu0 %v1217
    %1247 = vmatprep.subr.mxu0 0.0
    %1248 = vmatpush1.msra.mxu0 %v1218
    %1249 = vmatprep.subr.mxu0 0.0
    %1250 = vmatpush1.msra.mxu0 %v1219
    %1251 = vmatprep.subr.mxu0 0.0
    %1252 = vmatpush1.msra.mxu0 %v1220
    %1253 = vmatprep.subr.mxu0 0.0
    %1254 = vmatpush1.msra.mxu0 %v1221
    %1255 = vmatprep.subr.mxu0 0.0
    %1256 = vmatpush1.msra.mxu0 %v1222
    %1257 = vmatprep.subr.mxu0 0.0
    %1258 = vmatpush1.msra.mxu0 %v1223
    %1259 = vmatprep.subr.mxu0 0.0
    %1260 = vmatpush1.msra.mxu0 %v1224
    %1261 = vmatprep.subr.mxu0 0.0
    %1262 = vmatpush1.msra.mxu0 %v1225
    %1263 = vmatprep.subr.mxu0 0.0
    %1264 = vmatpush1.msra.mxu0 0.0
    %1265 = vmatprep.subr.mxu0 0.0
    %1266 = vmatpush1.msra.mxu0 0.0
    %1267 = vmatprep.subr.mxu0 0.0
    %1268 = vmatpush1.msra.mxu0 0.0
    %1269 = vmatprep.subr.mxu0 0.0
    %1270 = vmatpush1.msra.mxu0 0.0
    %1271 = vmatprep.subr.mxu0 0.0
    %1272 = vmatpush1.msra.mxu0 0.0
    %1273 = vmatprep.subr.mxu0 0.0
    %1274 = vmatpush1.msra.mxu0 0.0
    %1275 = vmatprep.subr.mxu0 0.0
    %1276 = vmatpush1.msra.mxu0 0.0
    %1277 = vmatprep.subr.mxu0 0.0
    %1278 = vmatpush1.msra.mxu0 0.0
    %1279 = vmatprep.subr.mxu0 0.0
    %1280 = vmatpush1.msra.mxu0 0.0
    %1281 = vmatprep.subr.mxu0 0.0
    %1282 = vmatpush1.msra.mxu0 0.0
    %1283 = vmatprep.subr.mxu0 0.0
    %1284 = vmatpush1.msra.mxu0 0.0
    %1285 = vmatprep.subr.mxu0 0.0
    %1286 = vmatpush1.msra.mxu0 0.0
    %1287 = vmatprep.subr.mxu0 0.0
    %1288 = vmatpush1.msra.mxu0 0.0
    %1289 = vmatprep.subr.mxu0 0.0
    %1290 = vmatpush1.msra.mxu0 0.0
    %1291 = vmatprep.subr.mxu0 0.0
    %1292 = vmatpush1.msra.mxu0 0.0
    %1293 = vmatprep.subr.mxu0 0.0
    %1294 = vmatpush1.msra.mxu0 0.0
    %1295 = vmatprep.mubr.f32.mxu0 0.0
    %1296 = vmatmul.mubr.f32.gmra.mrb[0].mxu0 %v1172
    %v1297 = vpop.f32.mrb[0].mxu0
    %v1298 = vadd.f32 %v1230, %v1297
    %v1299 = vpop.f32.mrb[0].mxu0
    %1300 = vmatprep.mubr.f32.mxu0 0.0
    %1301 = vmatmul.mubr.f32.gmra.mrb[0].mxu0 %v1177
    %v1302 = vpop.f32.mrb[0].mxu0
    %v1303 = vadd.f32 %v1230, %v1302
    %v1304 = vpop.f32.mrb[0].mxu0
    %1305 = vmatprep.mubr.f32.mxu0 0.0
    %1306 = vmatmul.mubr.f32.gmra.mrb[0].mxu0 %v1182
    %v1307 = vpop.f32.mrb[0].mxu0
    %v1308 = vadd.f32 %v1230, %v1307
    %v1309 = vpop.f32.mrb[0].mxu0
    %1310 = vmatprep.mubr.f32.mxu0 0.0
    %1311 = vmatmul.mubr.f32.gmra.mrb[0].mxu0 %v1187
    %v1312 = vpop.f32.mrb[0].mxu0
    %v1313 = vadd.f32 %v1230, %v1312
    %v1314 = vpop.f32.mrb[0].mxu0
    %1315 = vmatprep.mubr.f32.mxu0 0.0
    %1316 = vmatmul.mubr.f32.gmra.mrb[0].mxu0 %v1192
    %v1317 = vpop.f32.mrb[0].mxu0
    %v1318 = vadd.f32 %v1230, %v1317
    %v1319 = vpop.f32.mrb[0].mxu0
    %1320 = vmatprep.mubr.f32.mxu0 0.0
    %1321 = vmatmul.mubr.f32.gmra.mrb[0].mxu0 %v1197
    %v1322 = vpop.f32.mrb[0].mxu0
    %v1323 = vadd.f32 %v1230, %v1322
    %v1324 = vpop.f32.mrb[0].mxu0
    %1325 = vmatprep.mubr.f32.mxu0 0.0
    %1326 = vmatmul.mubr.f32.gmra.mrb[0].mxu0 %v1202
    %v1327 = vpop.f32.mrb[0].mxu0
    %v1328 = vadd.f32 %v1230, %v1327
    %v1329 = vpop.f32.mrb[0].mxu0
    %1330 = vmatprep.mubr.f32.mxu0 0.0
    %1331 = vmatmul.mubr.f32.gmra.mrb[0].mxu0 %v1207
    %v1332 = vpop.f32.mrb[0].mxu0
    %v1333 = vadd.f32 %v1230, %v1332
    %v1334 = vpop.f32.mrb[0].mxu0
    %1335 = vdwg.mxu0
    %v1336 = vmax.f32 %v1298, 0.0
    %v1337 = vmax.f32 %v1303, 0.0
    %v1338 = vmax.f32 %v1308, 0.0
    %v1339 = vmax.f32 %v1313, 0.0
    %v1340 = vmax.f32 %v1318, 0.0
    %v1341 = vmax.f32 %v1323, 0.0
    %v1342 = vmax.f32 %v1328, 0.0
    %v1343 = vmax.f32 %v1333, 0.0
    %v1344 = vld [vmem:[%s5] sm:$0x1]
    %v1345 = vlaneseq
    %v1346 = vshrl.u32 %v1345, 7
    %v1347 = vsub.s32 0, %v1346
    %v1348 = vrot.slane %v1344, %v1347
    %vm1349 = vcmp.eq.s32.totalorder %v142, %v1348
    %v1350 = vsel %vm1349, 1.0, 0.0
    %v1351 = vsel %vm846, %v1350, 0.0
    %1352 = vadd.xlane.f32.xlu0 %v1351
    %v1353 = vpop.xlane.xlu0 %1352
    %v1354 = vmax.f32 %v1353, 1.0
    %v1355 = vrcp.pop %v1354
    %v1356 = vmul.f32 %v1350, %v1355
    %v1358 = vsel %vm846, %v1356, 0
    %1360 = vmatprep.subr.mxu0 0.0
    %1361 = vmatpush1.msra.mxu0 %v1336
    %1362 = vmatprep.subr.mxu0 0.0
    %1363 = vmatpush1.msra.mxu0 %v1337
    %1364 = vmatprep.subr.mxu0 0.0
    %1365 = vmatpush1.msra.mxu0 %v1338
    %1366 = vmatprep.subr.mxu0 0.0
    %1367 = vmatpush1.msra.mxu0 %v1339
    %1368 = vmatprep.subr.mxu0 0.0
    %1369 = vmatpush1.msra.mxu0 %v1340
    %1370 = vmatprep.subr.mxu0 0.0
    %1371 = vmatpush1.msra.mxu0 %v1341
    %1372 = vmatprep.subr.mxu0 0.0
    %1373 = vmatpush1.msra.mxu0 %v1342
    %1374 = vmatprep.subr.mxu0 0.0
    %1375 = vmatpush1.msra.mxu0 %v1343
    %1376 = vmatprep.subr.mxu0 0.0
    %1377 = vmatpush1.msra.mxu0 0.0
    %1378 = vmatprep.subr.mxu0 0.0
    %1379 = vmatpush1.msra.mxu0 0.0
    %1380 = vmatprep.subr.mxu0 0.0
    %1381 = vmatpush1.msra.mxu0 0.0
    %1382 = vmatprep.subr.mxu0 0.0
    %1383 = vmatpush1.msra.mxu0 0.0
    %1384 = vmatprep.subr.mxu0 0.0
    %1385 = vmatpush1.msra.mxu0 0.0
    %1386 = vmatprep.subr.mxu0 0.0
    %1387 = vmatpush1.msra.mxu0 0.0
    %1388 = vmatprep.subr.mxu0 0.0
    %1389 = vmatpush1.msra.mxu0 0.0
    %1390 = vmatprep.subr.mxu0 0.0
    %1391 = vmatpush1.msra.mxu0 0.0
    %1392 = vmatprep.subr.mxu0 0.0
    %1393 = vmatpush1.msra.mxu0 0.0
    %1394 = vmatprep.subr.mxu0 0.0
    %1395 = vmatpush1.msra.mxu0 0.0
    %1396 = vmatprep.subr.mxu0 0.0
    %1397 = vmatpush1.msra.mxu0 0.0
    %1398 = vmatprep.subr.mxu0 0.0
    %1399 = vmatpush1.msra.mxu0 0.0
    %1400 = vmatprep.subr.mxu0 0.0
    %1401 = vmatpush1.msra.mxu0 0.0
    %1402 = vmatprep.subr.mxu0 0.0
    %1403 = vmatpush1.msra.mxu0 0.0
    %1404 = vmatprep.subr.mxu0 0.0
    %1405 = vmatpush1.msra.mxu0 0.0
    %1406 = vmatprep.subr.mxu0 0.0
    %1407 = vmatpush1.msra.mxu0 0.0
    %1408 = vmatprep.subr.mxu0 0.0
    %1409 = vmatpush1.msra.mxu0 0.0
    %1410 = vmatprep.subr.mxu0 0.0
    %1411 = vmatpush1.msra.mxu0 0.0
    %1412 = vmatprep.subr.mxu0 0.0
    %1413 = vmatpush1.msra.mxu0 0.0
    %1414 = vmatprep.subr.mxu0 0.0
    %1415 = vmatpush1.msra.mxu0 0.0
    %1416 = vmatprep.subr.mxu0 0.0
    %1417 = vmatpush1.msra.mxu0 0.0
    %1418 = vmatprep.subr.mxu0 0.0
    %1419 = vmatpush1.msra.mxu0 0.0
    %1420 = vmatprep.subr.mxu0 0.0
    %1421 = vmatpush1.msra.mxu0 0.0
    %1422 = vmatprep.subr.mxu0 0.0
    %1423 = vmatpush1.msra.mxu0 0.0
    %1424 = vmatprep.mubr.f32.mxu0 0.0
    %1425 = vmatmul.mubr.f32.gmra.mrb[0].mxu0 %v1358
    %v1426 = vpop.f32.mrb[0].mxu0
    %v1427 = vadd.f32 0.0, %v1426
    %v1428 = vpop.f32.mrb[0].mxu0
    %1429 = vdwg.mxu0
    %v1430 = vld [vmem:[#allocation2 + $0x1a0] sm:$0xff]
    %v1431 = vld [vmem:[#allocation2 + $0x1a8] sm:$0xff]
    %v1432 = vld [vmem:[#allocation2 + $0x1b0] sm:$0xff]
    %v1433 = vld [vmem:[#allocation2 + $0x1b8] sm:$0xff]
    %v1434 = vld [vmem:[#allocation2 + $0x1c0] sm:$0xff]
    %v1435 = vld [vmem:[#allocation2 + $0x1c8] sm:$0xff]
    %v1436 = vld [vmem:[#allocation2 + $0x1d0] sm:$0xff]
    %v1437 = vld [vmem:[#allocation2 + $0x1d8] sm:$0xff]
    %v1438 = vld [vmem:[#allocation2 + $0x1e0] sm:$0xff]
    %v1439 = vld [vmem:[#allocation2 + $0x1e8] sm:$0xff]
    %v1440 = vld [vmem:[#allocation2 + $0x1f0] sm:$0xff]
    %v1441 = vld [vmem:[#allocation2 + $0x1f8] sm:$0xff]
    %v1442 = vld [vmem:[#allocation2 + $0x200] sm:$0xff]
    %v1443 = vld [vmem:[#allocation2 + $0x208] sm:$0xff]
    %v1444 = vld [vmem:[#allocation2 + $0x210] sm:$0xff]
    %v1445 = vld [vmem:[#allocation2 + $0x218] sm:$0xff]
    %v1446 = vld [vmem:[#allocation2 + $0x220] sm:$0xff]
    %v1447 = vld [vmem:[#allocation2 + $0x228] sm:$0xff]
    %v1448 = vld [vmem:[#allocation2 + $0x230] sm:$0xff]
    %v1449 = vld [vmem:[#allocation2 + $0x238] sm:$0xff]
    %v1450 = vld [vmem:[#allocation2 + $0x240] sm:$0xff]
    %v1451 = vld [vmem:[#allocation2 + $0x248] sm:$0xff]
    %v1452 = vld [vmem:[#allocation2 + $0x250] sm:$0xff]
    %v1453 = vld [vmem:[#allocation2 + $0x258] sm:$0xff]
    %v1454 = vld [vmem:[#allocation2 + $0x260] sm:$0xff]
    %v1455 = vld [vmem:[#allocation2 + $0x268] sm:$0xff]
    %v1456 = vld [vmem:[#allocation2 + $0x270] sm:$0xff]
    %v1457 = vld [vmem:[#allocation2 + $0x278] sm:$0xff]
    %v1458 = vld [vmem:[#allocation2 + $0x280] sm:$0xff]
    %v1459 = vld [vmem:[#allocation2 + $0x288] sm:$0xff]
    %v1460 = vld [vmem:[#allocation2 + $0x290] sm:$0xff]
    %v1461 = vld [vmem:[#allocation2 + $0x298] sm:$0xff]
    %1462 = vmatprep.subr.mxu0 0.0
    %1463 = vmatpush1.msra.mxu0 %v1446
    %1464 = vmatprep.subr.mxu0 0.0
    %1465 = vmatpush1.msra.mxu0 %v1447
    %1466 = vmatprep.subr.mxu0 0.0
    %1467 = vmatpush1.msra.mxu0 %v1448
    %1468 = vmatprep.subr.mxu0 0.0
    %1469 = vmatpush1.msra.mxu0 %v1449
    %1470 = vmatprep.subr.mxu0 0.0
    %1471 = vmatpush1.msra.mxu0 %v1450
    %1472 = vmatprep.subr.mxu0 0.0
    %1473 = vmatpush1.msra.mxu0 %v1451
    %1474 = vmatprep.subr.mxu0 0.0
    %1475 = vmatpush1.msra.mxu0 %v1452
    %1476 = vmatprep.subr.mxu0 0.0
    %1477 = vmatpush1.msra.mxu0 %v1453
    %1478 = vmatprep.subr.mxu0 0.0
    %1479 = vmatpush1.msra.mxu0 %v1454
    %1480 = vmatprep.subr.mxu0 0.0
    %1481 = vmatpush1.msra.mxu0 %v1455
    %1482 = vmatprep.subr.mxu0 0.0
    %1483 = vmatpush1.msra.mxu0 %v1456
    %1484 = vmatprep.subr.mxu0 0.0
    %1485 = vmatpush1.msra.mxu0 %v1457
    %1486 = vmatprep.subr.mxu0 0.0
    %1487 = vmatpush1.msra.mxu0 %v1458
    %1488 = vmatprep.subr.mxu0 0.0
    %1489 = vmatpush1.msra.mxu0 %v1459
    %1490 = vmatprep.subr.mxu0 0.0
    %1491 = vmatpush1.msra.mxu0 %v1460
    %1492 = vmatprep.subr.mxu0 0.0
    %1493 = vmatpush1.msra.mxu0 %v1461
    %1494 = vmatprep.subr.mxu0 0.0
    %1495 = vmatpush1.msra.mxu0 0.0
    %1496 = vmatprep.subr.mxu0 0.0
    %1497 = vmatpush1.msra.mxu0 0.0
    %1498 = vmatprep.subr.mxu0 0.0
    %1499 = vmatpush1.msra.mxu0 0.0
    %1500 = vmatprep.subr.mxu0 0.0
    %1501 = vmatpush1.msra.mxu0 0.0
    %1502 = vmatprep.subr.mxu0 0.0
    %1503 = vmatpush1.msra.mxu0 0.0
    %1504 = vmatprep.subr.mxu0 0.0
    %1505 = vmatpush1.msra.mxu0 0.0
    %1506 = vmatprep.subr.mxu0 0.0
    %1507 = vmatpush1.msra.mxu0 0.0
    %1508 = vmatprep.subr.mxu0 0.0
    %1509 = vmatpush1.msra.mxu0 0.0
    %1510 = vmatprep.subr.mxu0 0.0
    %1511 = vmatpush1.msra.mxu0 0.0
    %1512 = vmatprep.subr.mxu0 0.0
    %1513 = vmatpush1.msra.mxu0 0.0
    %1514 = vmatprep.subr.mxu0 0.0
    %1515 = vmatpush1.msra.mxu0 0.0
    %1516 = vmatprep.subr.mxu0 0.0
    %1517 = vmatpush1.msra.mxu0 0.0
    %1518 = vmatprep.subr.mxu0 0.0
    %1519 = vmatpush1.msra.mxu0 0.0
    %1520 = vmatprep.subr.mxu0 0.0
    %1521 = vmatpush1.msra.mxu0 0.0
    %1522 = vmatprep.subr.mxu0 0.0
    %1523 = vmatpush1.msra.mxu0 0.0
    %1524 = vmatprep.subr.mxu0 0.0
    %1525 = vmatpush1.msra.mxu0 0.0
    %1526 = vmatprep.mubr.f32.mxu0 0.0
    %1527 = vmatmul.mubr.f32.gmra.mrb[0].mxu0 %v1427
    %v1528 = vpop.f32.mrb[0].mxu0
    %v1529 = vadd.f32 0.0, %v1528
    %v1530 = vpop.f32.mrb[0].mxu0
    %1531 = vdwg.mxu0
    %1532 = vmatprep.subr.mxu0 0.0
    %1533 = vmatpush1.msra.mxu0 %v1430
    %1534 = vmatprep.subr.mxu0 0.0
    %1535 = vmatpush1.msra.mxu0 %v1431
    %1536 = vmatprep.subr.mxu0 0.0
    %1537 = vmatpush1.msra.mxu0 %v1432
    %1538 = vmatprep.subr.mxu0 0.0
    %1539 = vmatpush1.msra.mxu0 %v1433
    %1540 = vmatprep.subr.mxu0 0.0
    %1541 = vmatpush1.msra.mxu0 %v1434
    %1542 = vmatprep.subr.mxu0 0.0
    %1543 = vmatpush1.msra.mxu0 %v1435
    %1544 = vmatprep.subr.mxu0 0.0
    %1545 = vmatpush1.msra.mxu0 %v1436
    %1546 = vmatprep.subr.mxu0 0.0
    %1547 = vmatpush1.msra.mxu0 %v1437
    %1548 = vmatprep.subr.mxu0 0.0
    %1549 = vmatpush1.msra.mxu0 %v1438
    %1550 = vmatprep.subr.mxu0 0.0
    %1551 = vmatpush1.msra.mxu0 %v1439
    %1552 = vmatprep.subr.mxu0 0.0
    %1553 = vmatpush1.msra.mxu0 %v1440
    %1554 = vmatprep.subr.mxu0 0.0
    %1555 = vmatpush1.msra.mxu0 %v1441
    %1556 = vmatprep.subr.mxu0 0.0
    %1557 = vmatpush1.msra.mxu0 %v1442
    %1558 = vmatprep.subr.mxu0 0.0
    %1559 = vmatpush1.msra.mxu0 %v1443
    %1560 = vmatprep.subr.mxu0 0.0
    %1561 = vmatpush1.msra.mxu0 %v1444
    %1562 = vmatprep.subr.mxu0 0.0
    %1563 = vmatpush1.msra.mxu0 %v1445
    %1564 = vmatprep.subr.mxu0 0.0
    %1565 = vmatpush1.msra.mxu0 0.0
    %1566 = vmatprep.subr.mxu0 0.0
    %1567 = vmatpush1.msra.mxu0 0.0
    %1568 = vmatprep.subr.mxu0 0.0
    %1569 = vmatpush1.msra.mxu0 0.0
    %1570 = vmatprep.subr.mxu0 0.0
    %1571 = vmatpush1.msra.mxu0 0.0
    %1572 = vmatprep.subr.mxu0 0.0
    %1573 = vmatpush1.msra.mxu0 0.0
    %1574 = vmatprep.subr.mxu0 0.0
    %1575 = vmatpush1.msra.mxu0 0.0
    %1576 = vmatprep.subr.mxu0 0.0
    %1577 = vmatpush1.msra.mxu0 0.0
    %1578 = vmatprep.subr.mxu0 0.0
    %1579 = vmatpush1.msra.mxu0 0.0
    %1580 = vmatprep.subr.mxu0 0.0
    %1581 = vmatpush1.msra.mxu0 0.0
    %1582 = vmatprep.subr.mxu0 0.0
    %1583 = vmatpush1.msra.mxu0 0.0
    %1584 = vmatprep.subr.mxu0 0.0
    %1585 = vmatpush1.msra.mxu0 0.0
    %1586 = vmatprep.subr.mxu0 0.0
    %1587 = vmatpush1.msra.mxu0 0.0
    %1588 = vmatprep.subr.mxu0 0.0
    %1589 = vmatpush1.msra.mxu0 0.0
    %1590 = vmatprep.subr.mxu0 0.0
    %1591 = vmatpush1.msra.mxu0 0.0
    %1592 = vmatprep.subr.mxu0 0.0
    %1593 = vmatpush1.msra.mxu0 0.0
    %1594 = vmatprep.subr.mxu0 0.0
    %1595 = vmatpush1.msra.mxu0 0.0
    %1596 = vmatprep.mubr.f32.mxu0 0.0
    %1597 = vmatmul.mubr.f32.gmra.mrb[0].mxu0 %v398
    %v1598 = vpop.f32.mrb[0].mxu0
    %v1599 = vadd.f32 %v1529, %v1598
    %v1600 = vpop.f32.mrb[0].mxu0
    %1601 = vdwg.mxu0
    %v1602 = vld [vmem:[%s7 + $0x3] sm:$0x1]
    %v1603 = vlaneseq
    %v1604 = vshrl.u32 %v1603, 7
    %v1605 = vsub.s32 0, %v1604
    %v1606 = vrot.slane %v1602, %v1605
    %v1607 = vadd.f32 %v1599, %v1606
    %v1608 = vmax.f32 %v1607, 0.0
    %v1609 = vld [vmem:[#allocation2 + $0x2a0] sm:$0xff]
    %v1610 = vld [vmem:[#allocation2 + $0x2a8] sm:$0xff]
    %v1611 = vld [vmem:[#allocation2 + $0x2b0] sm:$0xff]
    %v1612 = vld [vmem:[#allocation2 + $0x2b8] sm:$0xff]
    %v1613 = vld [vmem:[#allocation2 + $0x2c0] sm:$0xff]
    %v1614 = vld [vmem:[#allocation2 + $0x2c8] sm:$0xff]
    %v1615 = vld [vmem:[#allocation2 + $0x2d0] sm:$0xff]
    %v1616 = vld [vmem:[#allocation2 + $0x2d8] sm:$0xff]
    %v1617 = vld [vmem:[#allocation2 + $0x2e0] sm:$0xff]
    %v1618 = vld [vmem:[#allocation2 + $0x2e8] sm:$0xff]
    %v1619 = vld [vmem:[#allocation2 + $0x2f0] sm:$0xff]
    %v1620 = vld [vmem:[#allocation2 + $0x2f8] sm:$0xff]
    %v1621 = vld [vmem:[#allocation2 + $0x300] sm:$0xff]
    %v1622 = vld [vmem:[#allocation2 + $0x308] sm:$0xff]
    %v1623 = vld [vmem:[#allocation2 + $0x310] sm:$0xff]
    %v1624 = vld [vmem:[#allocation2 + $0x318] sm:$0xff]
    %v1625 = vld [vmem:[%s7 + $0x4] sm:$0x1]
    %v1626 = vlaneseq
    %v1627 = vshrl.u32 %v1626, 7
    %v1628 = vsub.s32 0, %v1627
    %v1629 = vrot.slane %v1625, %v1628
    %1630 = vmatprep.subr.mxu0 0.0
    %1631 = vmatpush1.msra.mxu0 %v1609
    %1632 = vmatprep.subr.mxu0 0.0
    %1633 = vmatpush1.msra.mxu0 %v1610
    %1634 = vmatprep.subr.mxu0 0.0
    %1635 = vmatpush1.msra.mxu0 %v1611
    %1636 = vmatprep.subr.mxu0 0.0
    %1637 = vmatpush1.msra.mxu0 %v1612
    %1638 = vmatprep.subr.mxu0 0.0
    %1639 = vmatpush1.msra.mxu0 %v1613
    %1640 = vmatprep.subr.mxu0 0.0
    %1641 = vmatpush1.msra.mxu0 %v1614
    %1642 = vmatprep.subr.mxu0 0.0
    %1643 = vmatpush1.msra.mxu0 %v1615
    %1644 = vmatprep.subr.mxu0 0.0
    %1645 = vmatpush1.msra.mxu0 %v1616
    %1646 = vmatprep.subr.mxu0 0.0
    %1647 = vmatpush1.msra.mxu0 %v1617
    %1648 = vmatprep.subr.mxu0 0.0
    %1649 = vmatpush1.msra.mxu0 %v1618
    %1650 = vmatprep.subr.mxu0 0.0
    %1651 = vmatpush1.msra.mxu0 %v1619
    %1652 = vmatprep.subr.mxu0 0.0
    %1653 = vmatpush1.msra.mxu0 %v1620
    %1654 = vmatprep.subr.mxu0 0.0
    %1655 = vmatpush1.msra.mxu0 %v1621
    %1656 = vmatprep.subr.mxu0 0.0
    %1657 = vmatpush1.msra.mxu0 %v1622
    %1658 = vmatprep.subr.mxu0 0.0
    %1659 = vmatpush1.msra.mxu0 %v1623
    %1660 = vmatprep.subr.mxu0 0.0
    %1661 = vmatpush1.msra.mxu0 %v1624
    %1662 = vmatprep.subr.mxu0 0.0
    %1663 = vmatpush1.msra.mxu0 0.0
    %1664 = vmatprep.subr.mxu0 0.0
    %1665 = vmatpush1.msra.mxu0 0.0
    %1666 = vmatprep.subr.mxu0 0.0
    %1667 = vmatpush1.msra.mxu0 0.0
    %1668 = vmatprep.subr.mxu0 0.0
    %1669 = vmatpush1.msra.mxu0 0.0
    %1670 = vmatprep.subr.mxu0 0.0
    %1671 = vmatpush1.msra.mxu0 0.0
    %1672 = vmatprep.subr.mxu0 0.0
    %1673 = vmatpush1.msra.mxu0 0.0
    %1674 = vmatprep.subr.mxu0 0.0
    %1675 = vmatpush1.msra.mxu0 0.0
    %1676 = vmatprep.subr.mxu0 0.0
    %1677 = vmatpush1.msra.mxu0 0.0
    %1678 = vmatprep.subr.mxu0 0.0
    %1679 = vmatpush1.msra.mxu0 0.0
    %1680 = vmatprep.subr.mxu0 0.0
    %1681 = vmatpush1.msra.mxu0 0.0
    %1682 = vmatprep.subr.mxu0 0.0
    %1683 = vmatpush1.msra.mxu0 0.0
    %1684 = vmatprep.subr.mxu0 0.0
    %1685 = vmatpush1.msra.mxu0 0.0
    %1686 = vmatprep.subr.mxu0 0.0
    %1687 = vmatpush1.msra.mxu0 0.0
    %1688 = vmatprep.subr.mxu0 0.0
    %1689 = vmatpush1.msra.mxu0 0.0
    %1690 = vmatprep.subr.mxu0 0.0
    %1691 = vmatpush1.msra.mxu0 0.0
    %1692 = vmatprep.subr.mxu0 0.0
    %1693 = vmatpush1.msra.mxu0 0.0
    %1694 = vmatprep.mubr.f32.mxu0 0.0
    %1695 = vmatmul.mubr.f32.gmra.mrb[0].mxu0 %v1608
    %v1696 = vpop.f32.mrb[0].mxu0
    %v1697 = vadd.f32 %v1629, %v1696
    %v1698 = vpop.f32.mrb[0].mxu0
    %1699 = vdwg.mxu0
    %v1700 = vmax.f32 %v1697, 0.0
    %v1701 = vld [vmem:[#allocation2 + $0x320] sm:$0xff]
    %v1702 = vld [vmem:[#allocation2 + $0x328] sm:$0xff]
    %v1703 = vld [vmem:[#allocation2 + $0x330] sm:$0xff]
    %v1704 = vld [vmem:[#allocation2 + $0x338] sm:$0xff]
    %v1705 = vld [vmem:[#allocation2 + $0x340] sm:$0xff]
    %v1706 = vld [vmem:[#allocation2 + $0x348] sm:$0xff]
    %v1707 = vld [vmem:[#allocation2 + $0x350] sm:$0xff]
    %v1708 = vld [vmem:[#allocation2 + $0x358] sm:$0xff]
    %v1709 = vld [vmem:[#allocation2 + $0x360] sm:$0xff]
    %v1710 = vld [vmem:[#allocation2 + $0x368] sm:$0xff]
    %v1711 = vld [vmem:[#allocation2 + $0x370] sm:$0xff]
    %v1712 = vld [vmem:[#allocation2 + $0x378] sm:$0xff]
    %v1713 = vld [vmem:[#allocation2 + $0x380] sm:$0xff]
    %v1714 = vld [vmem:[#allocation2 + $0x388] sm:$0xff]
    %v1715 = vld [vmem:[#allocation2 + $0x390] sm:$0xff]
    %v1716 = vld [vmem:[#allocation2 + $0x398] sm:$0xff]
    %v1717 = vld [vmem:[%s7 + $0x5] sm:$0x1]
    %v1718 = vlaneseq
    %v1719 = vshrl.u32 %v1718, 7
    %v1720 = vsub.s32 0, %v1719
    %v1721 = vrot.slane %v1717, %v1720
    %1722 = vmatprep.subr.mxu0 0.0
    %1723 = vmatpush1.msra.mxu0 %v1701
    %1724 = vmatprep.subr.mxu0 0.0
    %1725 = vmatpush1.msra.mxu0 %v1702
    %1726 = vmatprep.subr.mxu0 0.0
    %1727 = vmatpush1.msra.mxu0 %v1703
    %1728 = vmatprep.subr.mxu0 0.0
    %1729 = vmatpush1.msra.mxu0 %v1704
    %1730 = vmatprep.subr.mxu0 0.0
    %1731 = vmatpush1.msra.mxu0 %v1705
    %1732 = vmatprep.subr.mxu0 0.0
    %1733 = vmatpush1.msra.mxu0 %v1706
    %1734 = vmatprep.subr.mxu0 0.0
    %1735 = vmatpush1.msra.mxu0 %v1707
    %1736 = vmatprep.subr.mxu0 0.0
    %1737 = vmatpush1.msra.mxu0 %v1708
    %1738 = vmatprep.subr.mxu0 0.0
    %1739 = vmatpush1.msra.mxu0 %v1709
    %1740 = vmatprep.subr.mxu0 0.0
    %1741 = vmatpush1.msra.mxu0 %v1710
    %1742 = vmatprep.subr.mxu0 0.0
    %1743 = vmatpush1.msra.mxu0 %v1711
    %1744 = vmatprep.subr.mxu0 0.0
    %1745 = vmatpush1.msra.mxu0 %v1712
    %1746 = vmatprep.subr.mxu0 0.0
    %1747 = vmatpush1.msra.mxu0 %v1713
    %1748 = vmatprep.subr.mxu0 0.0
    %1749 = vmatpush1.msra.mxu0 %v1714
    %1750 = vmatprep.subr.mxu0 0.0
    %1751 = vmatpush1.msra.mxu0 %v1715
    %1752 = vmatprep.subr.mxu0 0.0
    %1753 = vmatpush1.msra.mxu0 %v1716
    %1754 = vmatprep.subr.mxu0 0.0
    %1755 = vmatpush1.msra.mxu0 0.0
    %1756 = vmatprep.subr.mxu0 0.0
    %1757 = vmatpush1.msra.mxu0 0.0
    %1758 = vmatprep.subr.mxu0 0.0
    %1759 = vmatpush1.msra.mxu0 0.0
    %1760 = vmatprep.subr.mxu0 0.0
    %1761 = vmatpush1.msra.mxu0 0.0
    %1762 = vmatprep.subr.mxu0 0.0
    %1763 = vmatpush1.msra.mxu0 0.0
    %1764 = vmatprep.subr.mxu0 0.0
    %1765 = vmatpush1.msra.mxu0 0.0
    %1766 = vmatprep.subr.mxu0 0.0
    %1767 = vmatpush1.msra.mxu0 0.0
    %1768 = vmatprep.subr.mxu0 0.0
    %1769 = vmatpush1.msra.mxu0 0.0
    %1770 = vmatprep.subr.mxu0 0.0
    %1771 = vmatpush1.msra.mxu0 0.0
    %1772 = vmatprep.subr.mxu0 0.0
    %1773 = vmatpush1.msra.mxu0 0.0
    %1774 = vmatprep.subr.mxu0 0.0
    %1775 = vmatpush1.msra.mxu0 0.0
    %1776 = vmatprep.subr.mxu0 0.0
    %1777 = vmatpush1.msra.mxu0 0.0
    %1778 = vmatprep.subr.mxu0 0.0
    %1779 = vmatpush1.msra.mxu0 0.0
    %1780 = vmatprep.subr.mxu0 0.0
    %1781 = vmatpush1.msra.mxu0 0.0
    %1782 = vmatprep.subr.mxu0 0.0
    %1783 = vmatpush1.msra.mxu0 0.0
    %1784 = vmatprep.subr.mxu0 0.0
    %1785 = vmatpush1.msra.mxu0 0.0
    %1786 = vmatprep.mubr.f32.mxu0 0.0
    %1787 = vmatmul.mubr.f32.gmra.mrb[0].mxu0 %v1700
    %v1788 = vpop.f32.mrb[0].mxu0
    %v1789 = vadd.f32 %v1721, %v1788
    %v1790 = vpop.f32.mrb[0].mxu0
    %1791 = vdwg.mxu0
    %1792 = vst [vmem:[%s8] sm:$0xff] %v1789
    // Predicated region
    $region38: #{forward.1} parent=1 // pred_check
      _
    $region39: #{forward.1} parent=1 // pred_check_branch
      %1794 = sbr.rel (0) target = $region41
    $region40: #{forward.1} parent=1 // pred_region
      _
    $region41: #{forward.1} parent=1 // pred_fallthru
      _
    // Predicated region
    $region42: #{forward.1} parent=1 // pred_check
      _
    $region43: #{forward.1} parent=1 // pred_check_branch
      %1796 = sbr.rel (0) target = $region45
    $region44: #{forward.1} parent=1 // pred_region
      _
    $region45: #{forward.1} parent=1 // pred_fallthru
      _
    %1797 = vsyncpa [#allocation3], 1

</llo_original>
